<compile_context>
chip_gen: v6e
topology: v6e:2x2x1
jax: 0.10.0
libtpu: 0.0.40
codegen_flags: <defaults>
</compile_context>

<pallas_src>
import functools

import jax
import jax.numpy as jnp
from jax import lax
from jax.experimental import pallas as pl
from jax.experimental.pallas import tpu as pltpu


# ----------------------------------------------------------------------------
# Fused kernel: expand (matmul+BN+ReLU6) -> depthwise 3x3x3 (+BN+ReLU6)
#               -> project (matmul+BN) -> residual add
# ----------------------------------------------------------------------------
def _fused_kernel(x_ref, w1_ref, b1_ref, wd_ref, b2_ref, w3_ref, b3_ref, o_ref,
                  *, D, H, W, Ch):
    x = x_ref[...]                                     # (D, H*W*Cin)   lane-dense

    # ---- expand 1x1x1 conv (+ folded BN scale) + shift + ReLU6 ----
    h = jnp.dot(x, w1_ref[...], preferred_element_type=jnp.float32)   # (D, H*W*Ch)
    h = jnp.clip(h + b1_ref[...], 0.0, 6.0)

    # ---- depthwise 3x3x3, stride 1, pad 1 (+ folded BN scale) + shift + ReLU6 ----
    HWC = H * W * Ch
    wd = wd_ref[...]                                   # (27, HWC) pre-masked / pre-scaled
    d_ids = lax.broadcasted_iota(jnp.int32, (D, HWC), 0)
    acc = jnp.zeros((D, HWC), jnp.float32)
    t = 0
    for dd in (-1, 0, 1):
        if dd == 0:
            hd = h
        else:
            hd = pltpu.roll(h, (-dd) % D, axis=0)                      # read row d+dd
            hd = jnp.where((d_ids + dd >= 0) & (d_ids + dd < D), hd, 0.0)
        for dh in (-1, 0, 1):
            for dw in (-1, 0, 1):
                lane_shift = (-(dh * W * Ch + dw * Ch)) % HWC          # read (h+dh, w+dw, c)
                tap = hd if lane_shift == 0 else pltpu.roll(hd, lane_shift, axis=1)
                acc = acc + tap * wd[t]                                # H/W masks folded in wd
                t += 1
    y = jnp.clip(acc + b2_ref[...], 0.0, 6.0)

    # ---- project 1x1x1 conv (+ folded BN scale) + shift + residual add ----
    out = jnp.dot(y, w3_ref[...], preferred_element_type=jnp.float32)  # (D, H*W*Cout)
    o_ref[...] = out + b3_ref[...] + x


# ----------------------------------------------------------------------------
# Module forward: build lane-layout params in plain JAX, then one pallas_call
# ----------------------------------------------------------------------------
def mobilev2_residual_3d(x, params):
    """x: (N, D, H, W, C_in) float32.  Returns (N, D, H, W, C_out)."""
    N, D, H, W, Cin = x.shape
    Ch = params["w1"].shape[1]
    Cout = params["w3"].shape[1]
    assert Cin == Cout, "only the residual (stride=1, inp==oup) variant is implemented"
    HW = H * W

    # Block-diagonal 1x1x1 weights so the pointwise convs are lane-dense matmuls
    # (BN scale folded into the weight columns).
    eye_hw = jnp.eye(HW, dtype=jnp.float32)
    w1f = params["w1"] * params["s1"]                                  # (Cin, Ch)
    w3f = params["w3"] * params["s3"]                                  # (Ch, Cout)
    w1_big = jnp.einsum("pq,ij->piqj", eye_hw, w1f).reshape(HW * Cin, HW * Ch)
    w3_big = jnp.einsum("pq,ij->piqj", eye_hw, w3f).reshape(HW * Ch, HW * Cout)
    b1_flat = jnp.tile(params["b1"], (1, HW))                          # (1, HW*Ch)
    b2_flat = jnp.tile(params["b2"], (1, HW))                          # (1, HW*Ch)
    b3_flat = jnp.tile(params["b3"], (1, HW))                          # (1, HW*Cout)

    # Depthwise taps: (27, HW*Ch), BN scale and H/W boundary masks pre-folded.
    lane = jnp.arange(HW * Ch)
    c_idx = lane % Ch
    w_idx = (lane // Ch) % W
    h_idx = lane // (Ch * W)
    s2 = params["s2"].reshape(-1)
    rows = []
    for dd in (-1, 0, 1):
        for dh in (-1, 0, 1):
            for dw in (-1, 0, 1):
                tapw = (params["wd"][dd + 1, dh + 1, dw + 1, :] * s2)[c_idx]
                ok = ((h_idx + dh >= 0) & (h_idx + dh < H)
                      & (w_idx + dw >= 0) & (w_idx + dw < W))
                rows.append(jnp.where(ok, tapw, 0.0))
    wd_flat = jnp.stack(rows, axis=0)                                   # (27, HW*Ch)

    x2 = x.reshape(N * D, HW * Cin)                                     # lane-dense input

    kernel = functools.partial(_fused_kernel, D=D, H=H, W=W, Ch=Ch)
    out2 = pl.pallas_call(
        kernel,
        out_shape=jax.ShapeDtypeStruct((N * D, HW * Cout), jnp.float32),
        grid=(N,),
        in_specs=[
            pl.BlockSpec((D, HW * Cin), lambda n: (n, 0)),
            pl.BlockSpec((HW * Cin, HW * Ch), lambda n: (0, 0)),
            pl.BlockSpec((1, HW * Ch), lambda n: (0, 0)),
            pl.BlockSpec((27, HW * Ch), lambda n: (0, 0)),
            pl.BlockSpec((1, HW * Ch), lambda n: (0, 0)),
            pl.BlockSpec((HW * Ch, HW * Cout), lambda n: (0, 0)),
            pl.BlockSpec((1, HW * Cout), lambda n: (0, 0)),
        ],
        out_specs=pl.BlockSpec((D, HW * Cout), lambda n: (n, 0)),
        compiler_params=pltpu.CompilerParams(dimension_semantics=("parallel",)),
    )(x2, w1_big, b1_flat, wd_flat, b2_flat, w3_big, b3_flat)

    return out2.reshape(N, D, H, W, Cout)


# ----------------------------------------------------------------------------
# Pure-JAX reference (lax.conv) for verification
# ----------------------------------------------------------------------------
def reference_forward(x, params):
    dn = ("NDHWC", "DHWIO", "NDHWC")
    Cin = params["w1"].shape[0]
    hidden = params["w1"].shape[1]
    Cout = params["w3"].shape[1]

    k1 = params["w1"].reshape(1, 1, 1, Cin, hidden)
    kd = params["wd"].reshape(3, 3, 3, 1, hidden)
    k3 = params["w3"].reshape(1, 1, 1, hidden, Cout)

    y = lax.conv_general_dilated(x, k1, (1, 1, 1), "VALID", dimension_numbers=dn)
    y = jnp.clip(y * params["s1"] + params["b1"], 0.0, 6.0)
    y = lax.conv_general_dilated(
        y, kd, (1, 1, 1), [(1, 1), (1, 1), (1, 1)],
        dimension_numbers=dn, feature_group_count=hidden)
    y = jnp.clip(y * params["s2"] + params["b2"], 0.0, 6.0)
    y = lax.conv_general_dilated(y, k3, (1, 1, 1), "VALID", dimension_numbers=dn)
    y = y * params["s3"] + params["b3"]
    return x + y


# ----------------------------------------------------------------------------
# Deterministic parameter construction (inference-mode BN folded)
# ----------------------------------------------------------------------------
def make_params(inp, oup, expanse_ratio, key):
    hidden = round(inp * expanse_ratio)
    k1, k2, k3 = jax.random.split(key, 3)
    eps = 1e-5

    def fold_bn(c, base):
        gamma = 1.0 + 0.10 * jnp.arange(c, dtype=jnp.float32) + base
        beta = 0.05 * jnp.arange(c, dtype=jnp.float32) - base
        mean = 0.02 * jnp.arange(c, dtype=jnp.float32)
        var = 1.0 + 0.03 * jnp.arange(c, dtype=jnp.float32)
        scale = gamma / jnp.sqrt(var + eps)
        shift = beta - mean * scale
        return scale.reshape(1, c), shift.reshape(1, c)

    s1, b1 = fold_bn(hidden, 0.01)
    s2, b2 = fold_bn(hidden, 0.02)
    s3, b3 = fold_bn(oup, 0.03)

    return {
        "w1": (jax.random.normal(k1, (inp, hidden), jnp.float32) * 0.3),
        "wd": (jax.random.normal(k2, (3, 3, 3, hidden), jnp.float32) * 0.3),
        "w3": (jax.random.normal(k3, (hidden, oup), jnp.float32) * 0.3),
        "s1": s1, "b1": b1, "s2": s2, "b2": b2, "s3": s3, "b3": b3,
    }


if __name__ == "__main__":
    # inp = oup = 4, expanse_ratio = 2 (hidden = 8), stride = (1,1,1) -> residual
    N, Cin, D, H, W = 2, 4, 8, 8, 8
    key = jax.random.PRNGKey(0)
    kx, kp = jax.random.split(key)

    params = make_params(Cin, Cin, 2, kp)
    # x in NDHWC (equivalent to PyTorch NCDHW [2, 4, 8, 8, 8] transposed)
    x = jax.random.normal(kx, (N, D, H, W, Cin), jnp.float32)

    fwd = jax.jit(mobilev2_residual_3d)
    out = jax.block_until_ready(fwd(x, params))

    ref = jax.block_until_ready(reference_forward(x, params))
    assert out.shape == ref.shape == (N, D, H, W, Cin)
    err = jnp.max(jnp.abs(out - ref))
    assert err < 2e-2, f"mismatch vs reference: {err}"

    print("KERNEL_OK")
</pallas_src>

<mosaic_0001>
module attributes {stable_mosaic.version = 11 : i64} {
  func.func @_fused_kernel(%arg0: i32, %arg1: memref<8x256xf32, #tpu.memory_space<vmem>>, %arg2: memref<256x512xf32, #tpu.memory_space<vmem>>, %arg3: memref<1x512xf32, #tpu.memory_space<vmem>>, %arg4: memref<27x512xf32, #tpu.memory_space<vmem>>, %arg5: memref<1x512xf32, #tpu.memory_space<vmem>>, %arg6: memref<512x256xf32, #tpu.memory_space<vmem>>, %arg7: memref<1x256xf32, #tpu.memory_space<vmem>>, %arg8: memref<8x256xf32, #tpu.memory_space<vmem>>) attributes {dimension_semantics = [#tpu.dimension_semantics<parallel>], iteration_bounds = array<i64: 2>, scalar_prefetch = 0 : i64, scratch_operands = 0 : i64, tpu.core_type = #tpu.core_type<tc>, window_params = [{transform_indices = @transform_0, window_bounds = array<i64: 8, 256>}, {pipeline_mode = #tpu.pipeline_mode<synchronous>, transform_indices = @transform_1, window_bounds = array<i64: 256, 512>}, {pipeline_mode = #tpu.pipeline_mode<synchronous>, transform_indices = @transform_2, window_bounds = array<i64: 1, 512>}, {pipeline_mode = #tpu.pipeline_mode<synchronous>, transform_indices = @transform_3, window_bounds = array<i64: 27, 512>}, {pipeline_mode = #tpu.pipeline_mode<synchronous>, transform_indices = @transform_4, window_bounds = array<i64: 1, 512>}, {pipeline_mode = #tpu.pipeline_mode<synchronous>, transform_indices = @transform_5, window_bounds = array<i64: 512, 256>}, {pipeline_mode = #tpu.pipeline_mode<synchronous>, transform_indices = @transform_6, window_bounds = array<i64: 1, 256>}, {transform_indices = @transform_7, window_bounds = array<i64: 8, 256>}]} {
    %c0 = arith.constant 0 : index
    %c0_0 = arith.constant 0 : index
    %0 = vector.load %arg1[%c0, %c0_0] : memref<8x256xf32, #tpu.memory_space<vmem>>, vector<8x256xf32>
    %c0_1 = arith.constant 0 : index
    %c0_2 = arith.constant 0 : index
    %1 = vector.load %arg2[%c0_1, %c0_2] : memref<256x512xf32, #tpu.memory_space<vmem>>, vector<256x512xf32>
    %cst = arith.constant dense<0.000000e+00> : vector<8x512xf32>
    %2 = tpu.matmul %0, %1, %cst {dimension_numbers = #tpu.dot_dimension_numbers<[1], [0], [0], [1], [0, 0, 1, 1], [], []>} : vector<8x256xf32>, vector<256x512xf32>, vector<8x512xf32> -> vector<8x512xf32>
    %c0_3 = arith.constant 0 : index
    %c0_4 = arith.constant 0 : index
    %3 = vector.load %arg3[%c0_3, %c0_4] : memref<1x512xf32, #tpu.memory_space<vmem>>, vector<1x512xf32>
    %4 = vector.broadcast %3 : vector<1x512xf32> to vector<8x512xf32>
    %5 = arith.addf %2, %4 : vector<8x512xf32>
    %cst_5 = arith.constant 0.000000e+00 : f32
    %cst_6 = arith.constant 6.000000e+00 : f32
    %6 = vector.broadcast %cst_5 : f32 to vector<8x512xf32>
    %7 = arith.maximumf %6, %5 : vector<8x512xf32>
    %8 = vector.broadcast %cst_6 : f32 to vector<8x512xf32>
    %9 = arith.minimumf %8, %7 : vector<8x512xf32>
    %c0_7 = arith.constant 0 : index
    %c0_8 = arith.constant 0 : index
    %10 = vector.load %arg4[%c0_7, %c0_8] : memref<27x512xf32, #tpu.memory_space<vmem>>, vector<27x512xf32>
    %11 = tpu.iota {dimensions = array<i32: 0>} : vector<8x512xi32>
    %cst_9 = arith.constant 0.000000e+00 : f32
    %12 = vector.broadcast %cst_9 : f32 to vector<8x512xf32>
    %c1_i32 = arith.constant 1 : i32
    %13 = tpu.dynamic_rotate %9 by %c1_i32 dim 0 : vector<8x512xf32>, i32 -> vector<8x512xf32>
    %c-1_i32 = arith.constant -1 : i32
    %14 = vector.broadcast %c-1_i32 : i32 to vector<8x512xi32>
    %15 = arith.addi %11, %14 : vector<8x512xi32>
    %c0_i32 = arith.constant 0 : i32
    %16 = vector.broadcast %c0_i32 : i32 to vector<8x512xi32>
    %17 = arith.cmpi sge, %15, %16 : vector<8x512xi32>
    %c-1_i32_10 = arith.constant -1 : i32
    %18 = vector.broadcast %c-1_i32_10 : i32 to vector<8x512xi32>
    %19 = arith.addi %11, %18 : vector<8x512xi32>
    %c8_i32 = arith.constant 8 : i32
    %20 = vector.broadcast %c8_i32 : i32 to vector<8x512xi32>
    %21 = arith.cmpi slt, %19, %20 : vector<8x512xi32>
    %22 = arith.andi %17, %21 : vector<8x512xi1>
    %cst_11 = arith.constant 0.000000e+00 : f32
    %23 = vector.broadcast %cst_11 : f32 to vector<8x512xf32>
    %24 = arith.select %22, %13, %23 : vector<8x512xi1>, vector<8x512xf32>
    %c72_i32 = arith.constant 72 : i32
    %25 = tpu.dynamic_rotate %24 by %c72_i32 dim 1 : vector<8x512xf32>, i32 -> vector<8x512xf32>
    %26 = vector.extract_strided_slice %10 {offsets = [0, 0], sizes = [1, 512], strides = [1, 1]} : vector<27x512xf32> to vector<1x512xf32>
    %27 = vector.shape_cast %26 : vector<1x512xf32> to vector<512xf32>
    %28 = vector.shape_cast %27 : vector<512xf32> to vector<1x512xf32>
    %29 = vector.broadcast %28 : vector<1x512xf32> to vector<8x512xf32>
    %30 = arith.mulf %25, %29 : vector<8x512xf32>
    %31 = arith.addf %12, %30 : vector<8x512xf32>
    %c64_i32 = arith.constant 64 : i32
    %32 = tpu.dynamic_rotate %24 by %c64_i32 dim 1 : vector<8x512xf32>, i32 -> vector<8x512xf32>
    %33 = vector.extract_strided_slice %10 {offsets = [1, 0], sizes = [1, 512], strides = [1, 1]} : vector<27x512xf32> to vector<1x512xf32>
    %34 = vector.shape_cast %33 : vector<1x512xf32> to vector<512xf32>
    %35 = vector.shape_cast %34 : vector<512xf32> to vector<1x512xf32>
    %36 = vector.broadcast %35 : vector<1x512xf32> to vector<8x512xf32>
    %37 = arith.mulf %32, %36 : vector<8x512xf32>
    %38 = arith.addf %31, %37 : vector<8x512xf32>
    %c56_i32 = arith.constant 56 : i32
    %39 = tpu.dynamic_rotate %24 by %c56_i32 dim 1 : vector<8x512xf32>, i32 -> vector<8x512xf32>
    %40 = vector.extract_strided_slice %10 {offsets = [2, 0], sizes = [1, 512], strides = [1, 1]} : vector<27x512xf32> to vector<1x512xf32>
    %41 = vector.shape_cast %40 : vector<1x512xf32> to vector<512xf32>
    %42 = vector.shape_cast %41 : vector<512xf32> to vector<1x512xf32>
    %43 = vector.broadcast %42 : vector<1x512xf32> to vector<8x512xf32>
    %44 = arith.mulf %39, %43 : vector<8x512xf32>
    %45 = arith.addf %38, %44 : vector<8x512xf32>
    %c8_i32_12 = arith.constant 8 : i32
    %46 = tpu.dynamic_rotate %24 by %c8_i32_12 dim 1 : vector<8x512xf32>, i32 -> vector<8x512xf32>
    %47 = vector.extract_strided_slice %10 {offsets = [3, 0], sizes = [1, 512], strides = [1, 1]} : vector<27x512xf32> to vector<1x512xf32>
    %48 = vector.shape_cast %47 : vector<1x512xf32> to vector<512xf32>
    %49 = vector.shape_cast %48 : vector<512xf32> to vector<1x512xf32>
    %50 = vector.broadcast %49 : vector<1x512xf32> to vector<8x512xf32>
    %51 = arith.mulf %46, %50 : vector<8x512xf32>
    %52 = arith.addf %45, %51 : vector<8x512xf32>
    %53 = vector.extract_strided_slice %10 {offsets = [4, 0], sizes = [1, 512], strides = [1, 1]} : vector<27x512xf32> to vector<1x512xf32>
    %54 = vector.shape_cast %53 : vector<1x512xf32> to vector<512xf32>
    %55 = vector.shape_cast %54 : vector<512xf32> to vector<1x512xf32>
    %56 = vector.broadcast %55 : vector<1x512xf32> to vector<8x512xf32>
    %57 = arith.mulf %24, %56 : vector<8x512xf32>
    %58 = arith.addf %52, %57 : vector<8x512xf32>
    %c504_i32 = arith.constant 504 : i32
    %59 = tpu.dynamic_rotate %24 by %c504_i32 dim 1 : vector<8x512xf32>, i32 -> vector<8x512xf32>
    %60 = vector.extract_strided_slice %10 {offsets = [5, 0], sizes = [1, 512], strides = [1, 1]} : vector<27x512xf32> to vector<1x512xf32>
    %61 = vector.shape_cast %60 : vector<1x512xf32> to vector<512xf32>
    %62 = vector.shape_cast %61 : vector<512xf32> to vector<1x512xf32>
    %63 = vector.broadcast %62 : vector<1x512xf32> to vector<8x512xf32>
    %64 = arith.mulf %59, %63 : vector<8x512xf32>
    %65 = arith.addf %58, %64 : vector<8x512xf32>
    %c456_i32 = arith.constant 456 : i32
    %66 = tpu.dynamic_rotate %24 by %c456_i32 dim 1 : vector<8x512xf32>, i32 -> vector<8x512xf32>
    %67 = vector.extract_strided_slice %10 {offsets = [6, 0], sizes = [1, 512], strides = [1, 1]} : vector<27x512xf32> to vector<1x512xf32>
    %68 = vector.shape_cast %67 : vector<1x512xf32> to vector<512xf32>
    %69 = vector.shape_cast %68 : vector<512xf32> to vector<1x512xf32>
    %70 = vector.broadcast %69 : vector<1x512xf32> to vector<8x512xf32>
    %71 = arith.mulf %66, %70 : vector<8x512xf32>
    %72 = arith.addf %65, %71 : vector<8x512xf32>
    %c448_i32 = arith.constant 448 : i32
    %73 = tpu.dynamic_rotate %24 by %c448_i32 dim 1 : vector<8x512xf32>, i32 -> vector<8x512xf32>
    %74 = vector.extract_strided_slice %10 {offsets = [7, 0], sizes = [1, 512], strides = [1, 1]} : vector<27x512xf32> to vector<1x512xf32>
    %75 = vector.shape_cast %74 : vector<1x512xf32> to vector<512xf32>
    %76 = vector.shape_cast %75 : vector<512xf32> to vector<1x512xf32>
    %77 = vector.broadcast %76 : vector<1x512xf32> to vector<8x512xf32>
    %78 = arith.mulf %73, %77 : vector<8x512xf32>
    %79 = arith.addf %72, %78 : vector<8x512xf32>
    %c440_i32 = arith.constant 440 : i32
    %80 = tpu.dynamic_rotate %24 by %c440_i32 dim 1 : vector<8x512xf32>, i32 -> vector<8x512xf32>
    %81 = vector.extract_strided_slice %10 {offsets = [8, 0], sizes = [1, 512], strides = [1, 1]} : vector<27x512xf32> to vector<1x512xf32>
    %82 = vector.shape_cast %81 : vector<1x512xf32> to vector<512xf32>
    %83 = vector.shape_cast %82 : vector<512xf32> to vector<1x512xf32>
    %84 = vector.broadcast %83 : vector<1x512xf32> to vector<8x512xf32>
    %85 = arith.mulf %80, %84 : vector<8x512xf32>
    %86 = arith.addf %79, %85 : vector<8x512xf32>
    %c72_i32_13 = arith.constant 72 : i32
    %87 = tpu.dynamic_rotate %9 by %c72_i32_13 dim 1 : vector<8x512xf32>, i32 -> vector<8x512xf32>
    %88 = vector.extract_strided_slice %10 {offsets = [9, 0], sizes = [1, 512], strides = [1, 1]} : vector<27x512xf32> to vector<1x512xf32>
    %89 = vector.shape_cast %88 : vector<1x512xf32> to vector<512xf32>
    %90 = vector.shape_cast %89 : vector<512xf32> to vector<1x512xf32>
    %91 = vector.broadcast %90 : vector<1x512xf32> to vector<8x512xf32>
    %92 = arith.mulf %87, %91 : vector<8x512xf32>
    %93 = arith.addf %86, %92 : vector<8x512xf32>
    %c64_i32_14 = arith.constant 64 : i32
    %94 = tpu.dynamic_rotate %9 by %c64_i32_14 dim 1 : vector<8x512xf32>, i32 -> vector<8x512xf32>
    %95 = vector.extract_strided_slice %10 {offsets = [10, 0], sizes = [1, 512], strides = [1, 1]} : vector<27x512xf32> to vector<1x512xf32>
    %96 = vector.shape_cast %95 : vector<1x512xf32> to vector<512xf32>
    %97 = vector.shape_cast %96 : vector<512xf32> to vector<1x512xf32>
    %98 = vector.broadcast %97 : vector<1x512xf32> to vector<8x512xf32>
    %99 = arith.mulf %94, %98 : vector<8x512xf32>
    %100 = arith.addf %93, %99 : vector<8x512xf32>
    %c56_i32_15 = arith.constant 56 : i32
    %101 = tpu.dynamic_rotate %9 by %c56_i32_15 dim 1 : vector<8x512xf32>, i32 -> vector<8x512xf32>
    %102 = vector.extract_strided_slice %10 {offsets = [11, 0], sizes = [1, 512], strides = [1, 1]} : vector<27x512xf32> to vector<1x512xf32>
    %103 = vector.shape_cast %102 : vector<1x512xf32> to vector<512xf32>
    %104 = vector.shape_cast %103 : vector<512xf32> to vector<1x512xf32>
    %105 = vector.broadcast %104 : vector<1x512xf32> to vector<8x512xf32>
    %106 = arith.mulf %101, %105 : vector<8x512xf32>
    %107 = arith.addf %100, %106 : vector<8x512xf32>
    %c8_i32_16 = arith.constant 8 : i32
    %108 = tpu.dynamic_rotate %9 by %c8_i32_16 dim 1 : vector<8x512xf32>, i32 -> vector<8x512xf32>
    %109 = vector.extract_strided_slice %10 {offsets = [12, 0], sizes = [1, 512], strides = [1, 1]} : vector<27x512xf32> to vector<1x512xf32>
    %110 = vector.shape_cast %109 : vector<1x512xf32> to vector<512xf32>
    %111 = vector.shape_cast %110 : vector<512xf32> to vector<1x512xf32>
    %112 = vector.broadcast %111 : vector<1x512xf32> to vector<8x512xf32>
    %113 = arith.mulf %108, %112 : vector<8x512xf32>
    %114 = arith.addf %107, %113 : vector<8x512xf32>
    %115 = vector.extract_strided_slice %10 {offsets = [13, 0], sizes = [1, 512], strides = [1, 1]} : vector<27x512xf32> to vector<1x512xf32>
    %116 = vector.shape_cast %115 : vector<1x512xf32> to vector<512xf32>
    %117 = vector.shape_cast %116 : vector<512xf32> to vector<1x512xf32>
    %118 = vector.broadcast %117 : vector<1x512xf32> to vector<8x512xf32>
    %119 = arith.mulf %9, %118 : vector<8x512xf32>
    %120 = arith.addf %114, %119 : vector<8x512xf32>
    %c504_i32_17 = arith.constant 504 : i32
    %121 = tpu.dynamic_rotate %9 by %c504_i32_17 dim 1 : vector<8x512xf32>, i32 -> vector<8x512xf32>
    %122 = vector.extract_strided_slice %10 {offsets = [14, 0], sizes = [1, 512], strides = [1, 1]} : vector<27x512xf32> to vector<1x512xf32>
    %123 = vector.shape_cast %122 : vector<1x512xf32> to vector<512xf32>
    %124 = vector.shape_cast %123 : vector<512xf32> to vector<1x512xf32>
    %125 = vector.broadcast %124 : vector<1x512xf32> to vector<8x512xf32>
    %126 = arith.mulf %121, %125 : vector<8x512xf32>
    %127 = arith.addf %120, %126 : vector<8x512xf32>
    %c456_i32_18 = arith.constant 456 : i32
    %128 = tpu.dynamic_rotate %9 by %c456_i32_18 dim 1 : vector<8x512xf32>, i32 -> vector<8x512xf32>
    %129 = vector.extract_strided_slice %10 {offsets = [15, 0], sizes = [1, 512], strides = [1, 1]} : vector<27x512xf32> to vector<1x512xf32>
    %130 = vector.shape_cast %129 : vector<1x512xf32> to vector<512xf32>
    %131 = vector.shape_cast %130 : vector<512xf32> to vector<1x512xf32>
    %132 = vector.broadcast %131 : vector<1x512xf32> to vector<8x512xf32>
    %133 = arith.mulf %128, %132 : vector<8x512xf32>
    %134 = arith.addf %127, %133 : vector<8x512xf32>
    %c448_i32_19 = arith.constant 448 : i32
    %135 = tpu.dynamic_rotate %9 by %c448_i32_19 dim 1 : vector<8x512xf32>, i32 -> vector<8x512xf32>
    %136 = vector.extract_strided_slice %10 {offsets = [16, 0], sizes = [1, 512], strides = [1, 1]} : vector<27x512xf32> to vector<1x512xf32>
    %137 = vector.shape_cast %136 : vector<1x512xf32> to vector<512xf32>
    %138 = vector.shape_cast %137 : vector<512xf32> to vector<1x512xf32>
    %139 = vector.broadcast %138 : vector<1x512xf32> to vector<8x512xf32>
    %140 = arith.mulf %135, %139 : vector<8x512xf32>
    %141 = arith.addf %134, %140 : vector<8x512xf32>
    %c440_i32_20 = arith.constant 440 : i32
    %142 = tpu.dynamic_rotate %9 by %c440_i32_20 dim 1 : vector<8x512xf32>, i32 -> vector<8x512xf32>
    %143 = vector.extract_strided_slice %10 {offsets = [17, 0], sizes = [1, 512], strides = [1, 1]} : vector<27x512xf32> to vector<1x512xf32>
    %144 = vector.shape_cast %143 : vector<1x512xf32> to vector<512xf32>
    %145 = vector.shape_cast %144 : vector<512xf32> to vector<1x512xf32>
    %146 = vector.broadcast %145 : vector<1x512xf32> to vector<8x512xf32>
    %147 = arith.mulf %142, %146 : vector<8x512xf32>
    %148 = arith.addf %141, %147 : vector<8x512xf32>
    %c7_i32 = arith.constant 7 : i32
    %149 = tpu.dynamic_rotate %9 by %c7_i32 dim 0 : vector<8x512xf32>, i32 -> vector<8x512xf32>
    %c1_i32_21 = arith.constant 1 : i32
    %150 = vector.broadcast %c1_i32_21 : i32 to vector<8x512xi32>
    %151 = arith.addi %11, %150 : vector<8x512xi32>
    %c0_i32_22 = arith.constant 0 : i32
    %152 = vector.broadcast %c0_i32_22 : i32 to vector<8x512xi32>
    %153 = arith.cmpi sge, %151, %152 : vector<8x512xi32>
    %c1_i32_23 = arith.constant 1 : i32
    %154 = vector.broadcast %c1_i32_23 : i32 to vector<8x512xi32>
    %155 = arith.addi %11, %154 : vector<8x512xi32>
    %c8_i32_24 = arith.constant 8 : i32
    %156 = vector.broadcast %c8_i32_24 : i32 to vector<8x512xi32>
    %157 = arith.cmpi slt, %155, %156 : vector<8x512xi32>
    %158 = arith.andi %153, %157 : vector<8x512xi1>
    %cst_25 = arith.constant 0.000000e+00 : f32
    %159 = vector.broadcast %cst_25 : f32 to vector<8x512xf32>
    %160 = arith.select %158, %149, %159 : vector<8x512xi1>, vector<8x512xf32>
    %c72_i32_26 = arith.constant 72 : i32
    %161 = tpu.dynamic_rotate %160 by %c72_i32_26 dim 1 : vector<8x512xf32>, i32 -> vector<8x512xf32>
    %162 = vector.extract_strided_slice %10 {offsets = [18, 0], sizes = [1, 512], strides = [1, 1]} : vector<27x512xf32> to vector<1x512xf32>
    %163 = vector.shape_cast %162 : vector<1x512xf32> to vector<512xf32>
    %164 = vector.shape_cast %163 : vector<512xf32> to vector<1x512xf32>
    %165 = vector.broadcast %164 : vector<1x512xf32> to vector<8x512xf32>
    %166 = arith.mulf %161, %165 : vector<8x512xf32>
    %167 = arith.addf %148, %166 : vector<8x512xf32>
    %c64_i32_27 = arith.constant 64 : i32
    %168 = tpu.dynamic_rotate %160 by %c64_i32_27 dim 1 : vector<8x512xf32>, i32 -> vector<8x512xf32>
    %169 = vector.extract_strided_slice %10 {offsets = [19, 0], sizes = [1, 512], strides = [1, 1]} : vector<27x512xf32> to vector<1x512xf32>
    %170 = vector.shape_cast %169 : vector<1x512xf32> to vector<512xf32>
    %171 = vector.shape_cast %170 : vector<512xf32> to vector<1x512xf32>
    %172 = vector.broadcast %171 : vector<1x512xf32> to vector<8x512xf32>
    %173 = arith.mulf %168, %172 : vector<8x512xf32>
    %174 = arith.addf %167, %173 : vector<8x512xf32>
    %c56_i32_28 = arith.constant 56 : i32
    %175 = tpu.dynamic_rotate %160 by %c56_i32_28 dim 1 : vector<8x512xf32>, i32 -> vector<8x512xf32>
    %176 = vector.extract_strided_slice %10 {offsets = [20, 0], sizes = [1, 512], strides = [1, 1]} : vector<27x512xf32> to vector<1x512xf32>
    %177 = vector.shape_cast %176 : vector<1x512xf32> to vector<512xf32>
    %178 = vector.shape_cast %177 : vector<512xf32> to vector<1x512xf32>
    %179 = vector.broadcast %178 : vector<1x512xf32> to vector<8x512xf32>
    %180 = arith.mulf %175, %179 : vector<8x512xf32>
    %181 = arith.addf %174, %180 : vector<8x512xf32>
    %c8_i32_29 = arith.constant 8 : i32
    %182 = tpu.dynamic_rotate %160 by %c8_i32_29 dim 1 : vector<8x512xf32>, i32 -> vector<8x512xf32>
    %183 = vector.extract_strided_slice %10 {offsets = [21, 0], sizes = [1, 512], strides = [1, 1]} : vector<27x512xf32> to vector<1x512xf32>
    %184 = vector.shape_cast %183 : vector<1x512xf32> to vector<512xf32>
    %185 = vector.shape_cast %184 : vector<512xf32> to vector<1x512xf32>
    %186 = vector.broadcast %185 : vector<1x512xf32> to vector<8x512xf32>
    %187 = arith.mulf %182, %186 : vector<8x512xf32>
    %188 = arith.addf %181, %187 : vector<8x512xf32>
    %189 = vector.extract_strided_slice %10 {offsets = [22, 0], sizes = [1, 512], strides = [1, 1]} : vector<27x512xf32> to vector<1x512xf32>
    %190 = vector.shape_cast %189 : vector<1x512xf32> to vector<512xf32>
    %191 = vector.shape_cast %190 : vector<512xf32> to vector<1x512xf32>
    %192 = vector.broadcast %191 : vector<1x512xf32> to vector<8x512xf32>
    %193 = arith.mulf %160, %192 : vector<8x512xf32>
    %194 = arith.addf %188, %193 : vector<8x512xf32>
    %c504_i32_30 = arith.constant 504 : i32
    %195 = tpu.dynamic_rotate %160 by %c504_i32_30 dim 1 : vector<8x512xf32>, i32 -> vector<8x512xf32>
    %196 = vector.extract_strided_slice %10 {offsets = [23, 0], sizes = [1, 512], strides = [1, 1]} : vector<27x512xf32> to vector<1x512xf32>
    %197 = vector.shape_cast %196 : vector<1x512xf32> to vector<512xf32>
    %198 = vector.shape_cast %197 : vector<512xf32> to vector<1x512xf32>
    %199 = vector.broadcast %198 : vector<1x512xf32> to vector<8x512xf32>
    %200 = arith.mulf %195, %199 : vector<8x512xf32>
    %201 = arith.addf %194, %200 : vector<8x512xf32>
    %c456_i32_31 = arith.constant 456 : i32
    %202 = tpu.dynamic_rotate %160 by %c456_i32_31 dim 1 : vector<8x512xf32>, i32 -> vector<8x512xf32>
    %203 = vector.extract_strided_slice %10 {offsets = [24, 0], sizes = [1, 512], strides = [1, 1]} : vector<27x512xf32> to vector<1x512xf32>
    %204 = vector.shape_cast %203 : vector<1x512xf32> to vector<512xf32>
    %205 = vector.shape_cast %204 : vector<512xf32> to vector<1x512xf32>
    %206 = vector.broadcast %205 : vector<1x512xf32> to vector<8x512xf32>
    %207 = arith.mulf %202, %206 : vector<8x512xf32>
    %208 = arith.addf %201, %207 : vector<8x512xf32>
    %c448_i32_32 = arith.constant 448 : i32
    %209 = tpu.dynamic_rotate %160 by %c448_i32_32 dim 1 : vector<8x512xf32>, i32 -> vector<8x512xf32>
    %210 = vector.extract_strided_slice %10 {offsets = [25, 0], sizes = [1, 512], strides = [1, 1]} : vector<27x512xf32> to vector<1x512xf32>
    %211 = vector.shape_cast %210 : vector<1x512xf32> to vector<512xf32>
    %212 = vector.shape_cast %211 : vector<512xf32> to vector<1x512xf32>
    %213 = vector.broadcast %212 : vector<1x512xf32> to vector<8x512xf32>
    %214 = arith.mulf %209, %213 : vector<8x512xf32>
    %215 = arith.addf %208, %214 : vector<8x512xf32>
    %c440_i32_33 = arith.constant 440 : i32
    %216 = tpu.dynamic_rotate %160 by %c440_i32_33 dim 1 : vector<8x512xf32>, i32 -> vector<8x512xf32>
    %217 = vector.extract_strided_slice %10 {offsets = [26, 0], sizes = [1, 512], strides = [1, 1]} : vector<27x512xf32> to vector<1x512xf32>
    %218 = vector.shape_cast %217 : vector<1x512xf32> to vector<512xf32>
    %219 = vector.shape_cast %218 : vector<512xf32> to vector<1x512xf32>
    %220 = vector.broadcast %219 : vector<1x512xf32> to vector<8x512xf32>
    %221 = arith.mulf %216, %220 : vector<8x512xf32>
    %222 = arith.addf %215, %221 : vector<8x512xf32>
    %c0_34 = arith.constant 0 : index
    %c0_35 = arith.constant 0 : index
    %223 = vector.load %arg5[%c0_34, %c0_35] : memref<1x512xf32, #tpu.memory_space<vmem>>, vector<1x512xf32>
    %224 = vector.broadcast %223 : vector<1x512xf32> to vector<8x512xf32>
    %225 = arith.addf %222, %224 : vector<8x512xf32>
    %cst_36 = arith.constant 0.000000e+00 : f32
    %cst_37 = arith.constant 6.000000e+00 : f32
    %226 = vector.broadcast %cst_36 : f32 to vector<8x512xf32>
    %227 = arith.maximumf %226, %225 : vector<8x512xf32>
    %228 = vector.broadcast %cst_37 : f32 to vector<8x512xf32>
    %229 = arith.minimumf %228, %227 : vector<8x512xf32>
    %c0_38 = arith.constant 0 : index
    %c0_39 = arith.constant 0 : index
    %230 = vector.load %arg6[%c0_38, %c0_39] : memref<512x256xf32, #tpu.memory_space<vmem>>, vector<512x256xf32>
    %cst_40 = arith.constant dense<0.000000e+00> : vector<8x256xf32>
    %231 = tpu.matmul %229, %230, %cst_40 {dimension_numbers = #tpu.dot_dimension_numbers<[1], [0], [0], [1], [0, 0, 1, 1], [], []>} : vector<8x512xf32>, vector<512x256xf32>, vector<8x256xf32> -> vector<8x256xf32>
    %c0_41 = arith.constant 0 : index
    %c0_42 = arith.constant 0 : index
    %232 = vector.load %arg7[%c0_41, %c0_42] : memref<1x256xf32, #tpu.memory_space<vmem>>, vector<1x256xf32>
    %233 = vector.broadcast %232 : vector<1x256xf32> to vector<8x256xf32>
    %234 = arith.addf %231, %233 : vector<8x256xf32>
    %235 = arith.addf %234, %0 : vector<8x256xf32>
    %c0_43 = arith.constant 0 : index
    %c0_44 = arith.constant 0 : index
    %236 = vector.load %arg8[%c0_43, %c0_44] : memref<8x256xf32, #tpu.memory_space<vmem>>, vector<8x256xf32>
    tpu.vector_store %arg8[%c0_43, %c0_44], %235 {strides = array<i32>} : memref<8x256xf32, #tpu.memory_space<vmem>>, vector<8x256xf32>,
    return
  }
  func.func @transform_0(%arg0: i32) -> (i32, i32) {
    %c0_i32 = arith.constant 0 : i32
    %c0_i32_0 = arith.constant 0 : i32
    return %arg0, %c0_i32 : i32, i32
  }
  func.func @transform_1(%arg0: i32) -> (i32, i32) {
    %c0_i32 = arith.constant 0 : i32
    %c0_i32_0 = arith.constant 0 : i32
    %c0_i32_1 = arith.constant 0 : i32
    return %c0_i32, %c0_i32_0 : i32, i32
  }
  func.func @transform_2(%arg0: i32) -> (i32, i32) {
    %c0_i32 = arith.constant 0 : i32
    %c0_i32_0 = arith.constant 0 : i32
    %c0_i32_1 = arith.constant 0 : i32
    return %c0_i32, %c0_i32_0 : i32, i32
  }
  func.func @transform_3(%arg0: i32) -> (i32, i32) {
    %c0_i32 = arith.constant 0 : i32
    %c0_i32_0 = arith.constant 0 : i32
    %c0_i32_1 = arith.constant 0 : i32
    return %c0_i32, %c0_i32_0 : i32, i32
  }
  func.func @transform_4(%arg0: i32) -> (i32, i32) {
    %c0_i32 = arith.constant 0 : i32
    %c0_i32_0 = arith.constant 0 : i32
    %c0_i32_1 = arith.constant 0 : i32
    return %c0_i32, %c0_i32_0 : i32, i32
  }
  func.func @transform_5(%arg0: i32) -> (i32, i32) {
    %c0_i32 = arith.constant 0 : i32
    %c0_i32_0 = arith.constant 0 : i32
    %c0_i32_1 = arith.constant 0 : i32
    return %c0_i32, %c0_i32_0 : i32, i32
  }
  func.func @transform_6(%arg0: i32) -> (i32, i32) {
    %c0_i32 = arith.constant 0 : i32
    %c0_i32_0 = arith.constant 0 : i32
    %c0_i32_1 = arith.constant 0 : i32
    return %c0_i32, %c0_i32_0 : i32, i32
  }
  func.func @transform_7(%arg0: i32) -> (i32, i32) {
    %c0_i32 = arith.constant 0 : i32
    %c0_i32_0 = arith.constant 0 : i32
    return %arg0, %c0_i32 : i32, i32
  }
}

</mosaic_0001>

<llo_original>
// kernel: mobilev2_residual_3d.1
$region0: #{mobilev2_residual_3d.1}
  #allocation0 [shape = 'u32[]', space=smem, size = 0x4, offset = 0x4, fixed_abs, tag = 'smem constant byte address 0x4 - core index']
  #allocation1 [shape = 'u32[144,128]{1,0:T(1,128)}', space=vmem, size = 0x12000, scoped, tag = 'internal scratch']
  %s0 = inlined_call_operand.vmem [shape: f32[16,256], index: 0, kind: input, shape index: {}]
  %s1 = inlined_call_operand.vmem [shape: f32[256,512], index: 1, kind: input, shape index: {}]
  %s2 = inlined_call_operand.vmem [shape: f32[1,512], index: 2, kind: input, shape index: {}]
  %s3 = inlined_call_operand.vmem [shape: f32[27,512], index: 3, kind: input, shape index: {}]
  %s4 = inlined_call_operand.vmem [shape: f32[1,512], index: 4, kind: input, shape index: {}]
  %s5 = inlined_call_operand.vmem [shape: f32[512,256], index: 5, kind: input, shape index: {}]
  %s6 = inlined_call_operand.vmem [shape: f32[1,256], index: 6, kind: input, shape index: {}]
  %s7 = inlined_call_operand.vmem [shape: f32[16,256], index: 7, kind: output, shape index: {}]
  %s8 = sld [smem:[#allocation0]]
  $region61: #{mobilev2_residual_3d.1} parent=0
    _
  %s10 = ssub.s32 1, %s8
  %s11 = scalar_select 0, %s10, %s8
  loop: start=0, step=1, limit=4
  $region2: #{mobilev2_residual_3d.1} parent=0 // loop_pre_header
    _
  $region3: #{mobilev2_residual_3d.1} parent=0 // loop_header
    %s13 = sphi 0, %s17
    %p14 = scmp.ge.s32.totalorder %s13, 4
    %s23 = sphi 0, %s25
    %s26 = sphi 0, %s23
    %s27 = sphi 0, %s26
    %s43 = sphi 0, %s27
    %s47 = sphi 0, %s47
    %s49 = sphi 0, %s47
    %s50 = sphi 0, %s49
    %s64 = sphi 0, %s50
    %s68 = sphi 0, %s68
    %s70 = sphi 0, %s68
    %s71 = sphi 0, %s70
    %s85 = sphi 0, %s71
    %s89 = sphi 0, %s89
    %s91 = sphi 0, %s89
    %s92 = sphi 0, %s91
    %s106 = sphi 0, %s92
    %s110 = sphi 0, %s110
    %s112 = sphi 0, %s110
    %s113 = sphi 0, %s112
    %s127 = sphi 0, %s113
    %s131 = sphi 0, %s131
    %s133 = sphi 0, %s131
    %s134 = sphi 0, %s133
    %s148 = sphi 0, %s134
    %s152 = sphi 0, %s152
    %s154 = sphi 0, %s152
    %s155 = sphi 0, %s154
    %s169 = sphi 0, %s155
    %s175 = sphi 0, %s177
    %s178 = sphi 0, %s175
    %s179 = sphi 0, %s178
    %s195 = sphi 0, %s179
  $region4: #{mobilev2_residual_3d.1} parent=0 // loop_header_branch
    %16 = sbr.rel (%p14) target = $region8
  $region5: #{mobilev2_residual_3d.1} parent=0 // loop_body
    %s18 = ssub.s32 %s13, 1
    %s19 = ssub.s32 %s13, 2
    %s20 = sadd.s32 %s13, 1
    %s21 = ssub.s32 %s13, %s20
    %p22 = scmp.eq.s32.totalorder %s21, 0
    %s24 = sadd.s32 %s23, 1
    %s25 = scalar_select %p22, %s23, %s24
    %p28 = pneg %p22
    %p29 = scmp.eq.s32.totalorder %s13, 1
    %p30 = por %p28, %p29
    %p31 = scmp.ne.s32.totalorder %s23, %s26
    %p32 = scmp.eq.s32.totalorder %s13, 0
    %p33 = por %p31, %p32
    %p34 = scmp.ne.s32.totalorder %s23, %s26
    %p35 = scmp.eq.s32.totalorder %s18, 1
    %p36 = por %p34, %p35
    %p37 = scmp.ne.s32.totalorder %s26, %s27
    %p38 = scmp.eq.s32.totalorder %s18, 0
    %p39 = por %p37, %p38
    %p40 = scmp.ne.s32.totalorder %s26, %s27
    %p41 = scmp.eq.s32.totalorder %s19, 1
    %p42 = por %p40, %p41
    %p44 = scmp.ne.s32.totalorder %s27, %s43
    %p45 = scmp.eq.s32.totalorder %s19, 0
    %p46 = por %p44, %p45
    %s48 = sadd.s32 %s47, 1
    %p51 = scmp.eq.s32.totalorder %s13, 1
    %p52 = scmp.ne.s32.totalorder %s47, %s49
    %p53 = scmp.eq.s32.totalorder %s13, 0
    %p54 = por %p52, %p53
    %p55 = scmp.ne.s32.totalorder %s47, %s49
    %p56 = scmp.eq.s32.totalorder %s18, 1
    %p57 = por %p55, %p56
    %p58 = scmp.ne.s32.totalorder %s49, %s50
    %p59 = scmp.eq.s32.totalorder %s18, 0
    %p60 = por %p58, %p59
    %p61 = scmp.ne.s32.totalorder %s49, %s50
    %p62 = scmp.eq.s32.totalorder %s19, 1
    %p63 = por %p61, %p62
    %p65 = scmp.ne.s32.totalorder %s50, %s64
    %p66 = scmp.eq.s32.totalorder %s19, 0
    %p67 = por %p65, %p66
    %s69 = sadd.s32 %s68, 1
    %p72 = scmp.eq.s32.totalorder %s13, 1
    %p73 = scmp.ne.s32.totalorder %s68, %s70
    %p74 = scmp.eq.s32.totalorder %s13, 0
    %p75 = por %p73, %p74
    %p76 = scmp.ne.s32.totalorder %s68, %s70
    %p77 = scmp.eq.s32.totalorder %s18, 1
    %p78 = por %p76, %p77
    %p79 = scmp.ne.s32.totalorder %s70, %s71
    %p80 = scmp.eq.s32.totalorder %s18, 0
    %p81 = por %p79, %p80
    %p82 = scmp.ne.s32.totalorder %s70, %s71
    %p83 = scmp.eq.s32.totalorder %s19, 1
    %p84 = por %p82, %p83
    %p86 = scmp.ne.s32.totalorder %s71, %s85
    %p87 = scmp.eq.s32.totalorder %s19, 0
    %p88 = por %p86, %p87
    %s90 = sadd.s32 %s89, 1
    %p93 = scmp.eq.s32.totalorder %s13, 1
    %p94 = scmp.ne.s32.totalorder %s89, %s91
    %p95 = scmp.eq.s32.totalorder %s13, 0
    %p96 = por %p94, %p95
    %p97 = scmp.ne.s32.totalorder %s89, %s91
    %p98 = scmp.eq.s32.totalorder %s18, 1
    %p99 = por %p97, %p98
    %p100 = scmp.ne.s32.totalorder %s91, %s92
    %p101 = scmp.eq.s32.totalorder %s18, 0
    %p102 = por %p100, %p101
    %p103 = scmp.ne.s32.totalorder %s91, %s92
    %p104 = scmp.eq.s32.totalorder %s19, 1
    %p105 = por %p103, %p104
    %p107 = scmp.ne.s32.totalorder %s92, %s106
    %p108 = scmp.eq.s32.totalorder %s19, 0
    %p109 = por %p107, %p108
    %s111 = sadd.s32 %s110, 1
    %p114 = scmp.eq.s32.totalorder %s13, 1
    %p115 = scmp.ne.s32.totalorder %s110, %s112
    %p116 = scmp.eq.s32.totalorder %s13, 0
    %p117 = por %p115, %p116
    %p118 = scmp.ne.s32.totalorder %s110, %s112
    %p119 = scmp.eq.s32.totalorder %s18, 1
    %p120 = por %p118, %p119
    %p121 = scmp.ne.s32.totalorder %s112, %s113
    %p122 = scmp.eq.s32.totalorder %s18, 0
    %p123 = por %p121, %p122
    %p124 = scmp.ne.s32.totalorder %s112, %s113
    %p125 = scmp.eq.s32.totalorder %s19, 1
    %p126 = por %p124, %p125
    %p128 = scmp.ne.s32.totalorder %s113, %s127
    %p129 = scmp.eq.s32.totalorder %s19, 0
    %p130 = por %p128, %p129
    %s132 = sadd.s32 %s131, 1
    %p135 = scmp.eq.s32.totalorder %s13, 1
    %p136 = scmp.ne.s32.totalorder %s131, %s133
    %p137 = scmp.eq.s32.totalorder %s13, 0
    %p138 = por %p136, %p137
    %p139 = scmp.ne.s32.totalorder %s131, %s133
    %p140 = scmp.eq.s32.totalorder %s18, 1
    %p141 = por %p139, %p140
    %p142 = scmp.ne.s32.totalorder %s133, %s134
    %p143 = scmp.eq.s32.totalorder %s18, 0
    %p144 = por %p142, %p143
    %p145 = scmp.ne.s32.totalorder %s133, %s134
    %p146 = scmp.eq.s32.totalorder %s19, 1
    %p147 = por %p145, %p146
    %p149 = scmp.ne.s32.totalorder %s134, %s148
    %p150 = scmp.eq.s32.totalorder %s19, 0
    %p151 = por %p149, %p150
    %s153 = sadd.s32 %s152, 1
    %p156 = scmp.eq.s32.totalorder %s13, 1
    %p157 = scmp.ne.s32.totalorder %s152, %s154
    %p158 = scmp.eq.s32.totalorder %s13, 0
    %p159 = por %p157, %p158
    %p160 = scmp.ne.s32.totalorder %s152, %s154
    %p161 = scmp.eq.s32.totalorder %s18, 1
    %p162 = por %p160, %p161
    %p163 = scmp.ne.s32.totalorder %s154, %s155
    %p164 = scmp.eq.s32.totalorder %s18, 0
    %p165 = por %p163, %p164
    %p166 = scmp.ne.s32.totalorder %s154, %s155
    %p167 = scmp.eq.s32.totalorder %s19, 1
    %p168 = por %p166, %p167
    %p170 = scmp.ne.s32.totalorder %s155, %s169
    %p171 = scmp.eq.s32.totalorder %s19, 0
    %p172 = por %p170, %p171
    %s173 = ssub.s32 %s13, %s20
    %p174 = scmp.eq.s32.totalorder %s173, 0
    %s176 = sadd.s32 %s175, 1
    %s177 = scalar_select %p174, %s175, %s176
    %p180 = pneg %p174
    %p181 = scmp.eq.s32.totalorder %s13, 1
    %p182 = por %p180, %p181
    %p183 = scmp.ne.s32.totalorder %s175, %s178
    %p184 = scmp.eq.s32.totalorder %s13, 0
    %p185 = por %p183, %p184
    %p186 = scmp.ne.s32.totalorder %s175, %s178
    %p187 = scmp.eq.s32.totalorder %s18, 1
    %p188 = por %p186, %p187
    %p189 = scmp.ne.s32.totalorder %s178, %s179
    %p190 = scmp.eq.s32.totalorder %s18, 0
    %p191 = por %p189, %p190
    %p192 = scmp.ne.s32.totalorder %s178, %s179
    %p193 = scmp.eq.s32.totalorder %s19, 1
    %p194 = por %p192, %p193
    %p196 = scmp.ne.s32.totalorder %s179, %s195
    %p197 = scmp.eq.s32.totalorder %s19, 0
    %p198 = por %p196, %p197
    %p199 = scmp.le.s32.totalorder 1, %s13
    %p200 = scmp.lt.s32.totalorder %s13, 3
    %p201 = pnand %p199, %p200
    %p202 = pneg %p201
    // Predicated region
    $region9: #{mobilev2_residual_3d.1} parent=5 // pred_check
      _
    $region10: #{mobilev2_residual_3d.1} parent=5 // pred_check_branch
      %204 = sbr.rel (%p201) target = $region12
    $region11: #{mobilev2_residual_3d.1} parent=5 // pred_region
      %s205 = ssub.s32 %s13, 1
      // Predicated region
      $region13: #{mobilev2_residual_3d.1} parent=11 // pred_check
        %p206 = pneg %p60
      $region14: #{mobilev2_residual_3d.1} parent=11 // pred_check_branch
        %208 = sbr.rel (%p206) target = $region16
      $region15: #{mobilev2_residual_3d.1} parent=11 // pred_region
        _
      $region16: #{mobilev2_residual_3d.1} parent=11 // pred_fallthru
        _
      // Predicated region
      $region17: #{mobilev2_residual_3d.1} parent=11 // pred_check
        %p209 = pneg %p81
      $region18: #{mobilev2_residual_3d.1} parent=11 // pred_check_branch
        %211 = sbr.rel (%p209) target = $region20
      $region19: #{mobilev2_residual_3d.1} parent=11 // pred_region
        _
      $region20: #{mobilev2_residual_3d.1} parent=11 // pred_fallthru
        _
      // Predicated region
      $region21: #{mobilev2_residual_3d.1} parent=11 // pred_check
        %p212 = pneg %p102
      $region22: #{mobilev2_residual_3d.1} parent=11 // pred_check_branch
        %214 = sbr.rel (%p212) target = $region24
      $region23: #{mobilev2_residual_3d.1} parent=11 // pred_region
        _
      $region24: #{mobilev2_residual_3d.1} parent=11 // pred_fallthru
        _
      // Predicated region
      $region25: #{mobilev2_residual_3d.1} parent=11 // pred_check
        %p215 = pneg %p123
      $region26: #{mobilev2_residual_3d.1} parent=11 // pred_check_branch
        %217 = sbr.rel (%p215) target = $region28
      $region27: #{mobilev2_residual_3d.1} parent=11 // pred_region
        _
      $region28: #{mobilev2_residual_3d.1} parent=11 // pred_fallthru
        _
      // Predicated region
      $region29: #{mobilev2_residual_3d.1} parent=11 // pred_check
        %p218 = pneg %p144
      $region30: #{mobilev2_residual_3d.1} parent=11 // pred_check_branch
        %220 = sbr.rel (%p218) target = $region32
      $region31: #{mobilev2_residual_3d.1} parent=11 // pred_region
        _
      $region32: #{mobilev2_residual_3d.1} parent=11 // pred_fallthru
        _
      // Predicated region
      $region33: #{mobilev2_residual_3d.1} parent=11 // pred_check
        %p221 = pneg %p165
      $region34: #{mobilev2_residual_3d.1} parent=11 // pred_check_branch
        %223 = sbr.rel (%p221) target = $region36
      $region35: #{mobilev2_residual_3d.1} parent=11 // pred_region
        _
      $region36: #{mobilev2_residual_3d.1} parent=11 // pred_fallthru
        _
    $region12: #{mobilev2_residual_3d.1} parent=5 // pred_fallthru
      _
    %p224 = scmp.lt.s32.totalorder %s13, 2
    // Predicated region
    $region37: #{mobilev2_residual_3d.1} parent=5 // pred_check
      %p225 = pneg %p224
    $region38: #{mobilev2_residual_3d.1} parent=5 // pred_check_branch
      %227 = sbr.rel (%p225) target = $region40
    $region39: #{mobilev2_residual_3d.1} parent=5 // pred_region
      // Predicated region
      $region41: #{mobilev2_residual_3d.1} parent=39 // pred_check
        %p228 = pneg %p33
      $region42: #{mobilev2_residual_3d.1} parent=39 // pred_check_branch
        %230 = sbr.rel (%p228) target = $region44
      $region43: #{mobilev2_residual_3d.1} parent=39 // pred_region
        %p231 = scmp.lt.s32.totalorder %s13, 1
        %s232 = scalar_select %p231, %s13, 1
        %s233 = smul.addr %s232, 2
        %s234 = smul.addr %s233, 8
        %s235 = scalar_lea.vmem %s0, %s234
      $region44: #{mobilev2_residual_3d.1} parent=39 // pred_fallthru
        _
    $region40: #{mobilev2_residual_3d.1} parent=5 // pred_fallthru
      _
    %p236 = scmp.le.s32.totalorder 1, %s13
    %p237 = scmp.lt.s32.totalorder %s13, 3
    %p238 = pnand %p236, %p237
    %p239 = pneg %p238
    // Predicated region
    $region45: #{mobilev2_residual_3d.1} parent=5 // pred_check
      _
    $region46: #{mobilev2_residual_3d.1} parent=5 // pred_check_branch
      %241 = sbr.rel (%p238) target = $region48
    $region47: #{mobilev2_residual_3d.1} parent=5 // pred_region
      %s242 = ssub.s32 %s13, 1
      %p243 = scmp.lt.s32.totalorder %s18, 1
      %s244 = scalar_select %p243, %s18, 1
      %s245 = smul.addr %s244, 2
      %s246 = smul.addr %s245, 8
      %s247 = scalar_lea.vmem %s0, %s246
      %p248 = pneg %p39
      %p249 = pneg %p36
      %p250 = pneg %p60
      %p251 = pneg %p57
      %p252 = pneg %p81
      %p253 = pneg %p78
      %p254 = pneg %p102
      %p255 = pneg %p99
      %p256 = pneg %p123
      %p257 = pneg %p120
      %p258 = pneg %p144
      %p259 = pneg %p141
      %p260 = pneg %p165
      %p261 = pneg %p162
      %p262 = pneg %p191
      %p263 = pneg %p188
      %p264 = scmp.lt.s32.totalorder %s18, 1
      %s265 = scalar_select %p264, %s18, 1
      %s266 = smul.addr %s265, 2
      %s267 = smul.addr %s266, 8
      %s268 = scalar_lea.vmem %s7, %s267
      %p269 = scmp.lt.s32.totalorder %s18, 1
      %s270 = scalar_select %p269, %s18, 1
      %s271 = smul.addr %s270, 2
      %s272 = smul.addr %s271, 8
      %s273 = scalar_lea.vmem %s0, %s272
      %p274 = scmp.lt.s32.totalorder %s18, 1
      %s275 = scalar_select %p274, %s18, 1
      %s276 = smul.addr %s275, 2
      %s277 = smul.addr %s276, 8
      %s278 = scalar_lea.vmem %s7, %s277
      %v279 = vld [vmem:[%s273] sm:$0xff]
      %v280 = vld [vmem:[%s273 + $0x8] sm:$0xff]
      %v281 = vld [vmem:[%s1] sm:$0xff]
      %v282 = vld [vmem:[%s1 + $0x8] sm:$0xff]
      %v283 = vld [vmem:[%s1 + $0x10] sm:$0xff]
      %v284 = vld [vmem:[%s1 + $0x18] sm:$0xff]
      %v285 = vld [vmem:[%s1 + $0x20] sm:$0xff]
      %v286 = vld [vmem:[%s1 + $0x28] sm:$0xff]
      %v287 = vld [vmem:[%s1 + $0x30] sm:$0xff]
      %v288 = vld [vmem:[%s1 + $0x38] sm:$0xff]
      %v289 = vld [vmem:[%s1 + $0x40] sm:$0xff]
      %v290 = vld [vmem:[%s1 + $0x48] sm:$0xff]
      %v291 = vld [vmem:[%s1 + $0x50] sm:$0xff]
      %v292 = vld [vmem:[%s1 + $0x58] sm:$0xff]
      %v293 = vld [vmem:[%s1 + $0x60] sm:$0xff]
      %v294 = vld [vmem:[%s1 + $0x68] sm:$0xff]
      %v295 = vld [vmem:[%s1 + $0x70] sm:$0xff]
      %v296 = vld [vmem:[%s1 + $0x78] sm:$0xff]
      %v297 = vld [vmem:[%s1 + $0x80] sm:$0xff]
      %v298 = vld [vmem:[%s1 + $0x88] sm:$0xff]
      %v299 = vld [vmem:[%s1 + $0x90] sm:$0xff]
      %v300 = vld [vmem:[%s1 + $0x98] sm:$0xff]
      %v301 = vld [vmem:[%s1 + $0xa0] sm:$0xff]
      %v302 = vld [vmem:[%s1 + $0xa8] sm:$0xff]
      %v303 = vld [vmem:[%s1 + $0xb0] sm:$0xff]
      %v304 = vld [vmem:[%s1 + $0xb8] sm:$0xff]
      %v305 = vld [vmem:[%s1 + $0xc0] sm:$0xff]
      %v306 = vld [vmem:[%s1 + $0xc8] sm:$0xff]
      %v307 = vld [vmem:[%s1 + $0xd0] sm:$0xff]
      %v308 = vld [vmem:[%s1 + $0xd8] sm:$0xff]
      %v309 = vld [vmem:[%s1 + $0xe0] sm:$0xff]
      %v310 = vld [vmem:[%s1 + $0xe8] sm:$0xff]
      %v311 = vld [vmem:[%s1 + $0xf0] sm:$0xff]
      %v312 = vld [vmem:[%s1 + $0xf8] sm:$0xff]
      %v313 = vld [vmem:[%s1 + $0x100] sm:$0xff]
      %v314 = vld [vmem:[%s1 + $0x108] sm:$0xff]
      %v315 = vld [vmem:[%s1 + $0x110] sm:$0xff]
      %v316 = vld [vmem:[%s1 + $0x118] sm:$0xff]
      %v317 = vld [vmem:[%s1 + $0x120] sm:$0xff]
      %v318 = vld [vmem:[%s1 + $0x128] sm:$0xff]
      %v319 = vld [vmem:[%s1 + $0x130] sm:$0xff]
      %v320 = vld [vmem:[%s1 + $0x138] sm:$0xff]
      %v321 = vld [vmem:[%s1 + $0x140] sm:$0xff]
      %v322 = vld [vmem:[%s1 + $0x148] sm:$0xff]
      %v323 = vld [vmem:[%s1 + $0x150] sm:$0xff]
      %v324 = vld [vmem:[%s1 + $0x158] sm:$0xff]
      %v325 = vld [vmem:[%s1 + $0x160] sm:$0xff]
      %v326 = vld [vmem:[%s1 + $0x168] sm:$0xff]
      %v327 = vld [vmem:[%s1 + $0x170] sm:$0xff]
      %v328 = vld [vmem:[%s1 + $0x178] sm:$0xff]
      %v329 = vld [vmem:[%s1 + $0x180] sm:$0xff]
      %v330 = vld [vmem:[%s1 + $0x188] sm:$0xff]
      %v331 = vld [vmem:[%s1 + $0x190] sm:$0xff]
      %v332 = vld [vmem:[%s1 + $0x198] sm:$0xff]
      %v333 = vld [vmem:[%s1 + $0x1a0] sm:$0xff]
      %v334 = vld [vmem:[%s1 + $0x1a8] sm:$0xff]
      %v335 = vld [vmem:[%s1 + $0x1b0] sm:$0xff]
      %v336 = vld [vmem:[%s1 + $0x1b8] sm:$0xff]
      %v337 = vld [vmem:[%s1 + $0x1c0] sm:$0xff]
      %v338 = vld [vmem:[%s1 + $0x1c8] sm:$0xff]
      %v339 = vld [vmem:[%s1 + $0x1d0] sm:$0xff]
      %v340 = vld [vmem:[%s1 + $0x1d8] sm:$0xff]
      %v341 = vld [vmem:[%s1 + $0x1e0] sm:$0xff]
      %v342 = vld [vmem:[%s1 + $0x1e8] sm:$0xff]
      %v343 = vld [vmem:[%s1 + $0x1f0] sm:$0xff]
      %v344 = vld [vmem:[%s1 + $0x1f8] sm:$0xff]
      %v345 = vld [vmem:[%s1 + $0x200] sm:$0xff]
      %v346 = vld [vmem:[%s1 + $0x208] sm:$0xff]
      %v347 = vld [vmem:[%s1 + $0x210] sm:$0xff]
      %v348 = vld [vmem:[%s1 + $0x218] sm:$0xff]
      %v349 = vld [vmem:[%s1 + $0x220] sm:$0xff]
      %v350 = vld [vmem:[%s1 + $0x228] sm:$0xff]
      %v351 = vld [vmem:[%s1 + $0x230] sm:$0xff]
      %v352 = vld [vmem:[%s1 + $0x238] sm:$0xff]
      %v353 = vld [vmem:[%s1 + $0x240] sm:$0xff]
      %v354 = vld [vmem:[%s1 + $0x248] sm:$0xff]
      %v355 = vld [vmem:[%s1 + $0x250] sm:$0xff]
      %v356 = vld [vmem:[%s1 + $0x258] sm:$0xff]
      %v357 = vld [vmem:[%s1 + $0x260] sm:$0xff]
      %v358 = vld [vmem:[%s1 + $0x268] sm:$0xff]
      %v359 = vld [vmem:[%s1 + $0x270] sm:$0xff]
      %v360 = vld [vmem:[%s1 + $0x278] sm:$0xff]
      %v361 = vld [vmem:[%s1 + $0x280] sm:$0xff]
      %v362 = vld [vmem:[%s1 + $0x288] sm:$0xff]
      %v363 = vld [vmem:[%s1 + $0x290] sm:$0xff]
      %v364 = vld [vmem:[%s1 + $0x298] sm:$0xff]
      %v365 = vld [vmem:[%s1 + $0x2a0] sm:$0xff]
      %v366 = vld [vmem:[%s1 + $0x2a8] sm:$0xff]
      %v367 = vld [vmem:[%s1 + $0x2b0] sm:$0xff]
      %v368 = vld [vmem:[%s1 + $0x2b8] sm:$0xff]
      %v369 = vld [vmem:[%s1 + $0x2c0] sm:$0xff]
      %v370 = vld [vmem:[%s1 + $0x2c8] sm:$0xff]
      %v371 = vld [vmem:[%s1 + $0x2d0] sm:$0xff]
      %v372 = vld [vmem:[%s1 + $0x2d8] sm:$0xff]
      %v373 = vld [vmem:[%s1 + $0x2e0] sm:$0xff]
      %v374 = vld [vmem:[%s1 + $0x2e8] sm:$0xff]
      %v375 = vld [vmem:[%s1 + $0x2f0] sm:$0xff]
      %v376 = vld [vmem:[%s1 + $0x2f8] sm:$0xff]
      %v377 = vld [vmem:[%s1 + $0x300] sm:$0xff]
      %v378 = vld [vmem:[%s1 + $0x308] sm:$0xff]
      %v379 = vld [vmem:[%s1 + $0x310] sm:$0xff]
      %v380 = vld [vmem:[%s1 + $0x318] sm:$0xff]
      %v381 = vld [vmem:[%s1 + $0x320] sm:$0xff]
      %v382 = vld [vmem:[%s1 + $0x328] sm:$0xff]
      %v383 = vld [vmem:[%s1 + $0x330] sm:$0xff]
      %v384 = vld [vmem:[%s1 + $0x338] sm:$0xff]
      %v385 = vld [vmem:[%s1 + $0x340] sm:$0xff]
      %v386 = vld [vmem:[%s1 + $0x348] sm:$0xff]
      %v387 = vld [vmem:[%s1 + $0x350] sm:$0xff]
      %v388 = vld [vmem:[%s1 + $0x358] sm:$0xff]
      %v389 = vld [vmem:[%s1 + $0x360] sm:$0xff]
      %v390 = vld [vmem:[%s1 + $0x368] sm:$0xff]
      %v391 = vld [vmem:[%s1 + $0x370] sm:$0xff]
      %v392 = vld [vmem:[%s1 + $0x378] sm:$0xff]
      %v393 = vld [vmem:[%s1 + $0x380] sm:$0xff]
      %v394 = vld [vmem:[%s1 + $0x388] sm:$0xff]
      %v395 = vld [vmem:[%s1 + $0x390] sm:$0xff]
      %v396 = vld [vmem:[%s1 + $0x398] sm:$0xff]
      %v397 = vld [vmem:[%s1 + $0x3a0] sm:$0xff]
      %v398 = vld [vmem:[%s1 + $0x3a8] sm:$0xff]
      %v399 = vld [vmem:[%s1 + $0x3b0] sm:$0xff]
      %v400 = vld [vmem:[%s1 + $0x3b8] sm:$0xff]
      %v401 = vld [vmem:[%s1 + $0x3c0] sm:$0xff]
      %v402 = vld [vmem:[%s1 + $0x3c8] sm:$0xff]
      %v403 = vld [vmem:[%s1 + $0x3d0] sm:$0xff]
      %v404 = vld [vmem:[%s1 + $0x3d8] sm:$0xff]
      %v405 = vld [vmem:[%s1 + $0x3e0] sm:$0xff]
      %v406 = vld [vmem:[%s1 + $0x3e8] sm:$0xff]
      %v407 = vld [vmem:[%s1 + $0x3f0] sm:$0xff]
      %v408 = vld [vmem:[%s1 + $0x3f8] sm:$0xff]
      %v409 = vld [vmem:[%s2] sm:$0xf]
      %v411 = vlaneseq
      %v412 = vshrl.u32 %v411, 7
      %v413 = vsub.s32 0, %v412
      %v414 = vrot.slane %v409, %v413
      %v415 = vlaneseq
      %v416 = vshrl.u32 %v415, 7
      %v417 = vsub.s32 1, %v416
      %v418 = vrot.slane %v409, %v417
      %v419 = vlaneseq
      %v420 = vshrl.u32 %v419, 7
      %v421 = vsub.s32 2, %v420
      %v422 = vrot.slane %v409, %v421
      %v423 = vlaneseq
      %v424 = vshrl.u32 %v423, 7
      %v425 = vsub.s32 3, %v424
      %v426 = vrot.slane %v409, %v425
      %431 = vmatprep.subr.mxu0 %v342
      %432 = vmatpush1.msra.mxu0 %v341
      %433 = vmatprep.subr.mxu0 %v338
      %434 = vmatpush1.msra.mxu0 %v337
      %435 = vmatprep.subr.mxu0 %v334
      %436 = vmatpush1.msra.mxu0 %v333
      %437 = vmatprep.subr.mxu0 %v330
      %438 = vmatpush1.msra.mxu0 %v329
      %439 = vmatprep.subr.mxu0 %v326
      %440 = vmatpush1.msra.mxu0 %v325
      %441 = vmatprep.subr.mxu0 %v322
      %442 = vmatpush1.msra.mxu0 %v321
      %443 = vmatprep.subr.mxu0 %v318
      %444 = vmatpush1.msra.mxu0 %v317
      %445 = vmatprep.subr.mxu0 %v314
      %446 = vmatpush1.msra.mxu0 %v313
      %447 = vmatprep.subr.mxu0 %v310
      %448 = vmatpush1.msra.mxu0 %v309
      %449 = vmatprep.subr.mxu0 %v306
      %450 = vmatpush1.msra.mxu0 %v305
      %451 = vmatprep.subr.mxu0 %v302
      %452 = vmatpush1.msra.mxu0 %v301
      %453 = vmatprep.subr.mxu0 %v298
      %454 = vmatpush1.msra.mxu0 %v297
      %455 = vmatprep.subr.mxu0 %v294
      %456 = vmatpush1.msra.mxu0 %v293
      %457 = vmatprep.subr.mxu0 %v290
      %458 = vmatpush1.msra.mxu0 %v289
      %459 = vmatprep.subr.mxu0 %v286
      %460 = vmatpush1.msra.mxu0 %v285
      %461 = vmatprep.subr.mxu0 %v282
      %462 = vmatpush1.msra.mxu0 %v281
      %463 = vmatprep.subr.mxu0 %v406
      %464 = vmatpush2.msra.mxu0 %v405
      %465 = vmatprep.subr.mxu0 %v402
      %466 = vmatpush2.msra.mxu0 %v401
      %467 = vmatprep.subr.mxu0 %v398
      %468 = vmatpush2.msra.mxu0 %v397
      %469 = vmatprep.subr.mxu0 %v394
      %470 = vmatpush2.msra.mxu0 %v393
      %471 = vmatprep.subr.mxu0 %v390
      %472 = vmatpush2.msra.mxu0 %v389
      %473 = vmatprep.subr.mxu0 %v386
      %474 = vmatpush2.msra.mxu0 %v385
      %475 = vmatprep.subr.mxu0 %v382
      %476 = vmatpush2.msra.mxu0 %v381
      %477 = vmatprep.subr.mxu0 %v378
      %478 = vmatpush2.msra.mxu0 %v377
      %479 = vmatprep.subr.mxu0 %v374
      %480 = vmatpush2.msra.mxu0 %v373
      %481 = vmatprep.subr.mxu0 %v370
      %482 = vmatpush2.msra.mxu0 %v369
      %483 = vmatprep.subr.mxu0 %v366
      %484 = vmatpush2.msra.mxu0 %v365
      %485 = vmatprep.subr.mxu0 %v362
      %486 = vmatpush2.msra.mxu0 %v361
      %487 = vmatprep.subr.mxu0 %v358
      %488 = vmatpush2.msra.mxu0 %v357
      %489 = vmatprep.subr.mxu0 %v354
      %490 = vmatpush2.msra.mxu0 %v353
      %491 = vmatprep.subr.mxu0 %v350
      %492 = vmatpush2.msra.mxu0 %v349
      %493 = vmatprep.subr.mxu0 %v346
      %494 = vmatpush2.msra.mxu0 %v345
      %495 = vmatprep.mubr.f32.mxu0 %v280
      %496 = vmatmul.mubr.f32.gmra.mxu0 %v279
      %v497 = vpop.f32.mrf.mxu0
      %v498 = vadd.f32 %v414, %v497
      %v499 = vpop.f32.mrf.mxu0
      %v500 = vadd.f32 %v418, %v499
      %501 = vdwg.mxu0
      %502 = vmatprep.subr.mxu0 %v344
      %503 = vmatpush1.msra.mxu0 %v343
      %504 = vmatprep.subr.mxu0 %v340
      %505 = vmatpush1.msra.mxu0 %v339
      %506 = vmatprep.subr.mxu0 %v336
      %507 = vmatpush1.msra.mxu0 %v335
      %508 = vmatprep.subr.mxu0 %v332
      %509 = vmatpush1.msra.mxu0 %v331
      %510 = vmatprep.subr.mxu0 %v328
      %511 = vmatpush1.msra.mxu0 %v327
      %512 = vmatprep.subr.mxu0 %v324
      %513 = vmatpush1.msra.mxu0 %v323
      %514 = vmatprep.subr.mxu0 %v320
      %515 = vmatpush1.msra.mxu0 %v319
      %516 = vmatprep.subr.mxu0 %v316
      %517 = vmatpush1.msra.mxu0 %v315
      %518 = vmatprep.subr.mxu0 %v312
      %519 = vmatpush1.msra.mxu0 %v311
      %520 = vmatprep.subr.mxu0 %v308
      %521 = vmatpush1.msra.mxu0 %v307
      %522 = vmatprep.subr.mxu0 %v304
      %523 = vmatpush1.msra.mxu0 %v303
      %524 = vmatprep.subr.mxu0 %v300
      %525 = vmatpush1.msra.mxu0 %v299
      %526 = vmatprep.subr.mxu0 %v296
      %527 = vmatpush1.msra.mxu0 %v295
      %528 = vmatprep.subr.mxu0 %v292
      %529 = vmatpush1.msra.mxu0 %v291
      %530 = vmatprep.subr.mxu0 %v288
      %531 = vmatpush1.msra.mxu0 %v287
      %532 = vmatprep.subr.mxu0 %v284
      %533 = vmatpush1.msra.mxu0 %v283
      %534 = vmatprep.subr.mxu0 %v408
      %535 = vmatpush2.msra.mxu0 %v407
      %536 = vmatprep.subr.mxu0 %v404
      %537 = vmatpush2.msra.mxu0 %v403
      %538 = vmatprep.subr.mxu0 %v400
      %539 = vmatpush2.msra.mxu0 %v399
      %540 = vmatprep.subr.mxu0 %v396
      %541 = vmatpush2.msra.mxu0 %v395
      %542 = vmatprep.subr.mxu0 %v392
      %543 = vmatpush2.msra.mxu0 %v391
      %544 = vmatprep.subr.mxu0 %v388
      %545 = vmatpush2.msra.mxu0 %v387
      %546 = vmatprep.subr.mxu0 %v384
      %547 = vmatpush2.msra.mxu0 %v383
      %548 = vmatprep.subr.mxu0 %v380
      %549 = vmatpush2.msra.mxu0 %v379
      %550 = vmatprep.subr.mxu0 %v376
      %551 = vmatpush2.msra.mxu0 %v375
      %552 = vmatprep.subr.mxu0 %v372
      %553 = vmatpush2.msra.mxu0 %v371
      %554 = vmatprep.subr.mxu0 %v368
      %555 = vmatpush2.msra.mxu0 %v367
      %556 = vmatprep.subr.mxu0 %v364
      %557 = vmatpush2.msra.mxu0 %v363
      %558 = vmatprep.subr.mxu0 %v360
      %559 = vmatpush2.msra.mxu0 %v359
      %560 = vmatprep.subr.mxu0 %v356
      %561 = vmatpush2.msra.mxu0 %v355
      %562 = vmatprep.subr.mxu0 %v352
      %563 = vmatpush2.msra.mxu0 %v351
      %564 = vmatprep.subr.mxu0 %v348
      %565 = vmatpush2.msra.mxu0 %v347
      %566 = vmatprep.mubr.f32.mxu0 %v280
      %567 = vmatmul.mubr.f32.gmra.mxu0 %v279
      %v568 = vpop.f32.mrf.mxu0
      %v569 = vadd.f32 %v422, %v568
      %v570 = vpop.f32.mrf.mxu0
      %v571 = vadd.f32 %v426, %v570
      %572 = vdwg.mxu0
      %v573 = vmax.f32 %v498, 0.0
      %v574 = vmax.f32 %v500, 0.0
      %v575 = vmax.f32 %v569, 0.0
      %v576 = vmax.f32 %v571, 0.0
      %v577 = vmin.f32 %v573, 6.0
      %v578 = vmin.f32 %v574, 6.0
      %v579 = vmin.f32 %v575, 6.0
      %v580 = vmin.f32 %v576, 6.0
      %v581 = vld [vmem:[%s3] sm:$0xff]
      %v582 = vld [vmem:[%s3 + $0x8] sm:$0xff]
      %v583 = vld [vmem:[%s3 + $0x10] sm:$0xff]
      %v584 = vld [vmem:[%s3 + $0x18] sm:$0xff]
      %v585 = vld [vmem:[%s3 + $0x20] sm:$0xff]
      %v586 = vld [vmem:[%s3 + $0x28] sm:$0xff]
      %v587 = vld [vmem:[%s3 + $0x30] sm:$0xff]
      %v588 = vld [vmem:[%s3 + $0x38] sm:$0xff]
      %v589 = vld [vmem:[%s3 + $0x40] sm:$0xff]
      %v590 = vld [vmem:[%s3 + $0x48] sm:$0xff]
      %v591 = vld [vmem:[%s3 + $0x50] sm:$0xff]
      %v592 = vld [vmem:[%s3 + $0x58] sm:$0xff]
      %v593 = vld [vmem:[%s3 + $0x60] sm:$0x7]
      %v594 = vld [vmem:[%s3 + $0x68] sm:$0x7]
      %v595 = vld [vmem:[%s3 + $0x70] sm:$0x7]
      %v596 = vld [vmem:[%s3 + $0x78] sm:$0x7]
      %v597 = vlaneseq
      %v598 = vshrl.u32 %v597, 7
      %v599 = vrot.slane %v577, 7
      %v600 = vrot.slane %v578, 7
      %v601 = vrot.slane %v579, 7
      %v602 = vrot.slane %v580, 7
      %v603 = vadd.s32 %v598, 4294967295
      %vm604 = vcmp.ge.s32.totalorder %v603, 0
      %vm605 = vcmp.lt.s32.totalorder %v603, 8
      %vm606 = vmand %vm604, %vm605
      %v607 = vsel %vm606, %v599, 0.0
      %v608 = vsel %vm606, %v600, 0.0
      %v609 = vsel %vm606, %v601, 0.0
      %v610 = vsel %vm606, %v602, 0.0
      %611 = vrot.lane.b32.xlu0 %v607, 72
      %v612 = vpop.permute.xlu0 %611
      %613 = vrot.lane.b32.xlu0 %v608, 72
      %v614 = vpop.permute.xlu0 %613
      %615 = vrot.lane.b32.xlu0 %v609, 72
      %v616 = vpop.permute.xlu0 %615
      %617 = vrot.lane.b32.xlu0 %v610, 72
      %v618 = vpop.permute.xlu0 %617
      %v619 = vlaneseq
      %v620 = vand.u32 %v619, 127
      %vm621 = vcmp.lt.s32.totalorder %v620, 72
      %v622 = vsel %vm621, %v616, %v618
      %v623 = vsel %vm621, %v614, %v616
      %v624 = vsel %vm621, %v612, %v614
      %v625 = vsel %vm621, %v618, %v612
      %v626 = vlaneseq
      %v627 = vshrl.u32 %v626, 7
      %v628 = vsub.s32 0, %v627
      %v629 = vrot.slane %v581, %v628
      %v630 = vlaneseq
      %v631 = vshrl.u32 %v630, 7
      %v632 = vsub.s32 0, %v631
      %v633 = vrot.slane %v582, %v632
      %v634 = vlaneseq
      %v635 = vshrl.u32 %v634, 7
      %v636 = vsub.s32 0, %v635
      %v637 = vrot.slane %v583, %v636
      %v638 = vlaneseq
      %v639 = vshrl.u32 %v638, 7
      %v640 = vsub.s32 0, %v639
      %v641 = vrot.slane %v584, %v640
      %v642 = vmul.f32 %v625, %v629
      %v643 = vmul.f32 %v624, %v633
      %v644 = vmul.f32 %v623, %v637
      %v645 = vmul.f32 %v622, %v641
      %v646 = vadd.f32 %v642, 0.0
      %v647 = vadd.f32 %v643, 0.0
      %v648 = vadd.f32 %v644, 0.0
      %v649 = vadd.f32 %v645, 0.0
      %650 = vrot.lane.b32.xlu0 %v607, 64
      %v651 = vpop.permute.xlu0 %650
      %652 = vrot.lane.b32.xlu0 %v608, 64
      %v653 = vpop.permute.xlu0 %652
      %654 = vrot.lane.b32.xlu0 %v609, 64
      %v655 = vpop.permute.xlu0 %654
      %656 = vrot.lane.b32.xlu0 %v610, 64
      %v657 = vpop.permute.xlu0 %656
      %vm658 = vcmp.lt.s32.totalorder %v620, 64
      %v659 = vsel %vm658, %v655, %v657
      %v660 = vsel %vm658, %v653, %v655
      %v661 = vsel %vm658, %v651, %v653
      %v662 = vsel %vm658, %v657, %v651
      %v663 = vlaneseq
      %v664 = vshrl.u32 %v663, 7
      %v665 = vsub.s32 1, %v664
      %v666 = vrot.slane %v581, %v665
      %v667 = vlaneseq
      %v668 = vshrl.u32 %v667, 7
      %v669 = vsub.s32 1, %v668
      %v670 = vrot.slane %v582, %v669
      %v671 = vlaneseq
      %v672 = vshrl.u32 %v671, 7
      %v673 = vsub.s32 1, %v672
      %v674 = vrot.slane %v583, %v673
      %v675 = vlaneseq
      %v676 = vshrl.u32 %v675, 7
      %v677 = vsub.s32 1, %v676
      %v678 = vrot.slane %v584, %v677
      %v679 = vmul.f32 %v662, %v666
      %v680 = vmul.f32 %v661, %v670
      %v681 = vmul.f32 %v660, %v674
      %v682 = vmul.f32 %v659, %v678
      %v683 = vadd.f32 %v646, %v679
      %v684 = vadd.f32 %v647, %v680
      %v685 = vadd.f32 %v648, %v681
      %v686 = vadd.f32 %v649, %v682
      %687 = vrot.lane.b32.xlu0 %v607, 56
      %v688 = vpop.permute.xlu0 %687
      %689 = vrot.lane.b32.xlu0 %v608, 56
      %v690 = vpop.permute.xlu0 %689
      %691 = vrot.lane.b32.xlu0 %v609, 56
      %v692 = vpop.permute.xlu0 %691
      %693 = vrot.lane.b32.xlu0 %v610, 56
      %v694 = vpop.permute.xlu0 %693
      %vm695 = vcmp.lt.s32.totalorder %v620, 56
      %v696 = vsel %vm695, %v692, %v694
      %v697 = vsel %vm695, %v690, %v692
      %v698 = vsel %vm695, %v688, %v690
      %v699 = vsel %vm695, %v694, %v688
      %v700 = vlaneseq
      %v701 = vshrl.u32 %v700, 7
      %v702 = vsub.s32 2, %v701
      %v703 = vrot.slane %v581, %v702
      %v704 = vlaneseq
      %v705 = vshrl.u32 %v704, 7
      %v706 = vsub.s32 2, %v705
      %v707 = vrot.slane %v582, %v706
      %v708 = vlaneseq
      %v709 = vshrl.u32 %v708, 7
      %v710 = vsub.s32 2, %v709
      %v711 = vrot.slane %v583, %v710
      %v712 = vlaneseq
      %v713 = vshrl.u32 %v712, 7
      %v714 = vsub.s32 2, %v713
      %v715 = vrot.slane %v584, %v714
      %v716 = vmul.f32 %v699, %v703
      %v717 = vmul.f32 %v698, %v707
      %v718 = vmul.f32 %v697, %v711
      %v719 = vmul.f32 %v696, %v715
      %v720 = vadd.f32 %v683, %v716
      %v721 = vadd.f32 %v684, %v717
      %v722 = vadd.f32 %v685, %v718
      %v723 = vadd.f32 %v686, %v719
      %724 = vrot.lane.b32.xlu0 %v607, 8
      %v725 = vpop.permute.xlu0 %724
      %726 = vrot.lane.b32.xlu0 %v608, 8
      %v727 = vpop.permute.xlu0 %726
      %728 = vrot.lane.b32.xlu0 %v609, 8
      %v729 = vpop.permute.xlu0 %728
      %730 = vrot.lane.b32.xlu0 %v610, 8
      %v731 = vpop.permute.xlu0 %730
      %vm732 = vcmp.lt.s32.totalorder %v620, 8
      %v733 = vsel %vm732, %v729, %v731
      %v734 = vsel %vm732, %v727, %v729
      %v735 = vsel %vm732, %v725, %v727
      %v736 = vsel %vm732, %v731, %v725
      %v737 = vlaneseq
      %v738 = vshrl.u32 %v737, 7
      %v739 = vsub.s32 3, %v738
      %v740 = vrot.slane %v581, %v739
      %v741 = vlaneseq
      %v742 = vshrl.u32 %v741, 7
      %v743 = vsub.s32 3, %v742
      %v744 = vrot.slane %v582, %v743
      %v745 = vlaneseq
      %v746 = vshrl.u32 %v745, 7
      %v747 = vsub.s32 3, %v746
      %v748 = vrot.slane %v583, %v747
      %v749 = vlaneseq
      %v750 = vshrl.u32 %v749, 7
      %v751 = vsub.s32 3, %v750
      %v752 = vrot.slane %v584, %v751
      %v753 = vmul.f32 %v736, %v740
      %v754 = vmul.f32 %v735, %v744
      %v755 = vmul.f32 %v734, %v748
      %v756 = vmul.f32 %v733, %v752
      %v757 = vadd.f32 %v720, %v753
      %v758 = vadd.f32 %v721, %v754
      %v759 = vadd.f32 %v722, %v755
      %v760 = vadd.f32 %v723, %v756
      %v761 = vlaneseq
      %v762 = vshrl.u32 %v761, 7
      %v763 = vsub.s32 4, %v762
      %v764 = vrot.slane %v581, %v763
      %v765 = vlaneseq
      %v766 = vshrl.u32 %v765, 7
      %v767 = vsub.s32 4, %v766
      %v768 = vrot.slane %v582, %v767
      %v769 = vlaneseq
      %v770 = vshrl.u32 %v769, 7
      %v771 = vsub.s32 4, %v770
      %v772 = vrot.slane %v583, %v771
      %v773 = vlaneseq
      %v774 = vshrl.u32 %v773, 7
      %v775 = vsub.s32 4, %v774
      %v776 = vrot.slane %v584, %v775
      %v777 = vmul.f32 %v607, %v764
      %v778 = vmul.f32 %v608, %v768
      %v779 = vmul.f32 %v609, %v772
      %v780 = vmul.f32 %v610, %v776
      %v781 = vadd.f32 %v757, %v777
      %v782 = vadd.f32 %v758, %v778
      %v783 = vadd.f32 %v759, %v779
      %v784 = vadd.f32 %v760, %v780
      %785 = vrot.lane.b32.xlu0 %v607, 120
      %v786 = vpop.permute.xlu0 %785
      %787 = vrot.lane.b32.xlu0 %v608, 120
      %v788 = vpop.permute.xlu0 %787
      %789 = vrot.lane.b32.xlu0 %v609, 120
      %v790 = vpop.permute.xlu0 %789
      %791 = vrot.lane.b32.xlu0 %v610, 120
      %v792 = vpop.permute.xlu0 %791
      %vm793 = vcmp.lt.s32.totalorder %v620, 120
      %v794 = vsel %vm793, %v790, %v792
      %v795 = vsel %vm793, %v788, %v790
      %v796 = vsel %vm793, %v786, %v788
      %v797 = vsel %vm793, %v792, %v786
      %v798 = vlaneseq
      %v799 = vshrl.u32 %v798, 7
      %v800 = vsub.s32 5, %v799
      %v801 = vrot.slane %v581, %v800
      %v802 = vlaneseq
      %v803 = vshrl.u32 %v802, 7
      %v804 = vsub.s32 5, %v803
      %v805 = vrot.slane %v582, %v804
      %v806 = vlaneseq
      %v807 = vshrl.u32 %v806, 7
      %v808 = vsub.s32 5, %v807
      %v809 = vrot.slane %v583, %v808
      %v810 = vlaneseq
      %v811 = vshrl.u32 %v810, 7
      %v812 = vsub.s32 5, %v811
      %v813 = vrot.slane %v584, %v812
      %v814 = vmul.f32 %v796, %v801
      %v815 = vmul.f32 %v795, %v805
      %v816 = vmul.f32 %v794, %v809
      %v817 = vmul.f32 %v797, %v813
      %v818 = vadd.f32 %v781, %v814
      %v819 = vadd.f32 %v782, %v815
      %v820 = vadd.f32 %v783, %v816
      %v821 = vadd.f32 %v784, %v817
      %v822 = vlaneseq
      %v823 = vshrl.u32 %v822, 7
      %v824 = vsub.s32 6, %v823
      %v825 = vrot.slane %v581, %v824
      %v826 = vlaneseq
      %v827 = vshrl.u32 %v826, 7
      %v828 = vsub.s32 6, %v827
      %v829 = vrot.slane %v582, %v828
      %v830 = vlaneseq
      %v831 = vshrl.u32 %v830, 7
      %v832 = vsub.s32 6, %v831
      %v833 = vrot.slane %v583, %v832
      %v834 = vlaneseq
      %v835 = vshrl.u32 %v834, 7
      %v836 = vsub.s32 6, %v835
      %v837 = vrot.slane %v584, %v836
      %v838 = vmul.f32 %v624, %v825
      %v839 = vmul.f32 %v623, %v829
      %v840 = vmul.f32 %v622, %v833
      %v841 = vmul.f32 %v625, %v837
      %v842 = vadd.f32 %v818, %v838
      %v843 = vadd.f32 %v819, %v839
      %v844 = vadd.f32 %v820, %v840
      %v845 = vadd.f32 %v821, %v841
      %v846 = vlaneseq
      %v847 = vshrl.u32 %v846, 7
      %v848 = vsub.s32 7, %v847
      %v849 = vrot.slane %v581, %v848
      %v850 = vlaneseq
      %v851 = vshrl.u32 %v850, 7
      %v852 = vsub.s32 7, %v851
      %v853 = vrot.slane %v582, %v852
      %v854 = vlaneseq
      %v855 = vshrl.u32 %v854, 7
      %v856 = vsub.s32 7, %v855
      %v857 = vrot.slane %v583, %v856
      %v858 = vlaneseq
      %v859 = vshrl.u32 %v858, 7
      %v860 = vsub.s32 7, %v859
      %v861 = vrot.slane %v584, %v860
      %v862 = vmul.f32 %v661, %v849
      %v863 = vmul.f32 %v660, %v853
      %v864 = vmul.f32 %v659, %v857
      %v865 = vmul.f32 %v662, %v861
      %v866 = vadd.f32 %v842, %v862
      %v867 = vadd.f32 %v843, %v863
      %v868 = vadd.f32 %v844, %v864
      %v869 = vadd.f32 %v845, %v865
      %v870 = vlaneseq
      %v871 = vshrl.u32 %v870, 7
      %v872 = vsub.s32 0, %v871
      %v873 = vrot.slane %v585, %v872
      %v874 = vlaneseq
      %v875 = vshrl.u32 %v874, 7
      %v876 = vsub.s32 0, %v875
      %v877 = vrot.slane %v586, %v876
      %v878 = vlaneseq
      %v879 = vshrl.u32 %v878, 7
      %v880 = vsub.s32 0, %v879
      %v881 = vrot.slane %v587, %v880
      %v882 = vlaneseq
      %v883 = vshrl.u32 %v882, 7
      %v884 = vsub.s32 0, %v883
      %v885 = vrot.slane %v588, %v884
      %v886 = vmul.f32 %v698, %v873
      %v887 = vmul.f32 %v697, %v877
      %v888 = vmul.f32 %v696, %v881
      %v889 = vmul.f32 %v699, %v885
      %v890 = vadd.f32 %v866, %v886
      %v891 = vadd.f32 %v867, %v887
      %v892 = vadd.f32 %v868, %v888
      %v893 = vadd.f32 %v869, %v889
      %894 = vrot.lane.b32.xlu0 %v577, 72
      %v895 = vpop.permute.xlu0 %894
      %896 = vrot.lane.b32.xlu0 %v578, 72
      %v897 = vpop.permute.xlu0 %896
      %898 = vrot.lane.b32.xlu0 %v579, 72
      %v899 = vpop.permute.xlu0 %898
      %900 = vrot.lane.b32.xlu0 %v580, 72
      %v901 = vpop.permute.xlu0 %900
      %v902 = vsel %vm621, %v899, %v901
      %v903 = vsel %vm621, %v897, %v899
      %v904 = vsel %vm621, %v895, %v897
      %v905 = vsel %vm621, %v901, %v895
      %v906 = vlaneseq
      %v907 = vshrl.u32 %v906, 7
      %v908 = vsub.s32 1, %v907
      %v909 = vrot.slane %v585, %v908
      %v910 = vlaneseq
      %v911 = vshrl.u32 %v910, 7
      %v912 = vsub.s32 1, %v911
      %v913 = vrot.slane %v586, %v912
      %v914 = vlaneseq
      %v915 = vshrl.u32 %v914, 7
      %v916 = vsub.s32 1, %v915
      %v917 = vrot.slane %v587, %v916
      %v918 = vlaneseq
      %v919 = vshrl.u32 %v918, 7
      %v920 = vsub.s32 1, %v919
      %v921 = vrot.slane %v588, %v920
      %v922 = vmul.f32 %v905, %v909
      %v923 = vmul.f32 %v904, %v913
      %v924 = vmul.f32 %v903, %v917
      %v925 = vmul.f32 %v902, %v921
      %v926 = vadd.f32 %v890, %v922
      %v927 = vadd.f32 %v891, %v923
      %v928 = vadd.f32 %v892, %v924
      %v929 = vadd.f32 %v893, %v925
      %930 = vrot.lane.b32.xlu0 %v577, 64
      %v931 = vpop.permute.xlu0 %930
      %932 = vrot.lane.b32.xlu0 %v578, 64
      %v933 = vpop.permute.xlu0 %932
      %934 = vrot.lane.b32.xlu0 %v579, 64
      %v935 = vpop.permute.xlu0 %934
      %936 = vrot.lane.b32.xlu0 %v580, 64
      %v937 = vpop.permute.xlu0 %936
      %v938 = vsel %vm658, %v935, %v937
      %v939 = vsel %vm658, %v933, %v935
      %v940 = vsel %vm658, %v931, %v933
      %v941 = vsel %vm658, %v937, %v931
      %v942 = vlaneseq
      %v943 = vshrl.u32 %v942, 7
      %v944 = vsub.s32 2, %v943
      %v945 = vrot.slane %v585, %v944
      %v946 = vlaneseq
      %v947 = vshrl.u32 %v946, 7
      %v948 = vsub.s32 2, %v947
      %v949 = vrot.slane %v586, %v948
      %v950 = vlaneseq
      %v951 = vshrl.u32 %v950, 7
      %v952 = vsub.s32 2, %v951
      %v953 = vrot.slane %v587, %v952
      %v954 = vlaneseq
      %v955 = vshrl.u32 %v954, 7
      %v956 = vsub.s32 2, %v955
      %v957 = vrot.slane %v588, %v956
      %v958 = vmul.f32 %v941, %v945
      %v959 = vmul.f32 %v940, %v949
      %v960 = vmul.f32 %v939, %v953
      %v961 = vmul.f32 %v938, %v957
      %v962 = vadd.f32 %v926, %v958
      %v963 = vadd.f32 %v927, %v959
      %v964 = vadd.f32 %v928, %v960
      %v965 = vadd.f32 %v929, %v961
      %966 = vrot.lane.b32.xlu0 %v577, 56
      %v967 = vpop.permute.xlu0 %966
      %968 = vrot.lane.b32.xlu0 %v578, 56
      %v969 = vpop.permute.xlu0 %968
      %970 = vrot.lane.b32.xlu0 %v579, 56
      %v971 = vpop.permute.xlu0 %970
      %972 = vrot.lane.b32.xlu0 %v580, 56
      %v973 = vpop.permute.xlu0 %972
      %v974 = vsel %vm695, %v971, %v973
      %v975 = vsel %vm695, %v969, %v971
      %v976 = vsel %vm695, %v967, %v969
      %v977 = vsel %vm695, %v973, %v967
      %v978 = vlaneseq
      %v979 = vshrl.u32 %v978, 7
      %v980 = vsub.s32 3, %v979
      %v981 = vrot.slane %v585, %v980
      %v982 = vlaneseq
      %v983 = vshrl.u32 %v982, 7
      %v984 = vsub.s32 3, %v983
      %v985 = vrot.slane %v586, %v984
      %v986 = vlaneseq
      %v987 = vshrl.u32 %v986, 7
      %v988 = vsub.s32 3, %v987
      %v989 = vrot.slane %v587, %v988
      %v990 = vlaneseq
      %v991 = vshrl.u32 %v990, 7
      %v992 = vsub.s32 3, %v991
      %v993 = vrot.slane %v588, %v992
      %v994 = vmul.f32 %v977, %v981
      %v995 = vmul.f32 %v976, %v985
      %v996 = vmul.f32 %v975, %v989
      %v997 = vmul.f32 %v974, %v993
      %v998 = vadd.f32 %v962, %v994
      %v999 = vadd.f32 %v963, %v995
      %v1000 = vadd.f32 %v964, %v996
      %v1001 = vadd.f32 %v965, %v997
      %1002 = vrot.lane.b32.xlu0 %v577, 8
      %v1003 = vpop.permute.xlu0 %1002
      %1004 = vrot.lane.b32.xlu0 %v578, 8
      %v1005 = vpop.permute.xlu0 %1004
      %1006 = vrot.lane.b32.xlu0 %v579, 8
      %v1007 = vpop.permute.xlu0 %1006
      %1008 = vrot.lane.b32.xlu0 %v580, 8
      %v1009 = vpop.permute.xlu0 %1008
      %v1010 = vsel %vm732, %v1007, %v1009
      %v1011 = vsel %vm732, %v1005, %v1007
      %v1012 = vsel %vm732, %v1003, %v1005
      %v1013 = vsel %vm732, %v1009, %v1003
      %v1014 = vlaneseq
      %v1015 = vshrl.u32 %v1014, 7
      %v1016 = vsub.s32 4, %v1015
      %v1017 = vrot.slane %v585, %v1016
      %v1018 = vlaneseq
      %v1019 = vshrl.u32 %v1018, 7
      %v1020 = vsub.s32 4, %v1019
      %v1021 = vrot.slane %v586, %v1020
      %v1022 = vlaneseq
      %v1023 = vshrl.u32 %v1022, 7
      %v1024 = vsub.s32 4, %v1023
      %v1025 = vrot.slane %v587, %v1024
      %v1026 = vlaneseq
      %v1027 = vshrl.u32 %v1026, 7
      %v1028 = vsub.s32 4, %v1027
      %v1029 = vrot.slane %v588, %v1028
      %v1030 = vmul.f32 %v1013, %v1017
      %v1031 = vmul.f32 %v1012, %v1021
      %v1032 = vmul.f32 %v1011, %v1025
      %v1033 = vmul.f32 %v1010, %v1029
      %v1034 = vadd.f32 %v998, %v1030
      %v1035 = vadd.f32 %v999, %v1031
      %v1036 = vadd.f32 %v1000, %v1032
      %v1037 = vadd.f32 %v1001, %v1033
      %v1038 = vlaneseq
      %v1039 = vshrl.u32 %v1038, 7
      %v1040 = vsub.s32 5, %v1039
      %v1041 = vrot.slane %v585, %v1040
      %v1042 = vlaneseq
      %v1043 = vshrl.u32 %v1042, 7
      %v1044 = vsub.s32 5, %v1043
      %v1045 = vrot.slane %v586, %v1044
      %v1046 = vlaneseq
      %v1047 = vshrl.u32 %v1046, 7
      %v1048 = vsub.s32 5, %v1047
      %v1049 = vrot.slane %v587, %v1048
      %v1050 = vlaneseq
      %v1051 = vshrl.u32 %v1050, 7
      %v1052 = vsub.s32 5, %v1051
      %v1053 = vrot.slane %v588, %v1052
      %v1054 = vmul.f32 %v577, %v1041
      %v1055 = vmul.f32 %v578, %v1045
      %v1056 = vmul.f32 %v579, %v1049
      %v1057 = vmul.f32 %v580, %v1053
      %v1058 = vadd.f32 %v1034, %v1054
      %v1059 = vadd.f32 %v1035, %v1055
      %v1060 = vadd.f32 %v1036, %v1056
      %v1061 = vadd.f32 %v1037, %v1057
      %1062 = vrot.lane.b32.xlu0 %v577, 120
      %v1063 = vpop.permute.xlu0 %1062
      %1064 = vrot.lane.b32.xlu0 %v578, 120
      %v1065 = vpop.permute.xlu0 %1064
      %1066 = vrot.lane.b32.xlu0 %v579, 120
      %v1067 = vpop.permute.xlu0 %1066
      %1068 = vrot.lane.b32.xlu0 %v580, 120
      %v1069 = vpop.permute.xlu0 %1068
      %v1070 = vsel %vm793, %v1067, %v1069
      %v1071 = vsel %vm793, %v1065, %v1067
      %v1072 = vsel %vm793, %v1063, %v1065
      %v1073 = vsel %vm793, %v1069, %v1063
      %v1074 = vlaneseq
      %v1075 = vshrl.u32 %v1074, 7
      %v1076 = vsub.s32 6, %v1075
      %v1077 = vrot.slane %v585, %v1076
      %v1078 = vlaneseq
      %v1079 = vshrl.u32 %v1078, 7
      %v1080 = vsub.s32 6, %v1079
      %v1081 = vrot.slane %v586, %v1080
      %v1082 = vlaneseq
      %v1083 = vshrl.u32 %v1082, 7
      %v1084 = vsub.s32 6, %v1083
      %v1085 = vrot.slane %v587, %v1084
      %v1086 = vlaneseq
      %v1087 = vshrl.u32 %v1086, 7
      %v1088 = vsub.s32 6, %v1087
      %v1089 = vrot.slane %v588, %v1088
      %v1090 = vmul.f32 %v1072, %v1077
      %v1091 = vmul.f32 %v1071, %v1081
      %v1092 = vmul.f32 %v1070, %v1085
      %v1093 = vmul.f32 %v1073, %v1089
      %v1094 = vadd.f32 %v1058, %v1090
      %v1095 = vadd.f32 %v1059, %v1091
      %v1096 = vadd.f32 %v1060, %v1092
      %v1097 = vadd.f32 %v1061, %v1093
      %v1098 = vlaneseq
      %v1099 = vshrl.u32 %v1098, 7
      %v1100 = vsub.s32 7, %v1099
      %v1101 = vrot.slane %v585, %v1100
      %v1102 = vlaneseq
      %v1103 = vshrl.u32 %v1102, 7
      %v1104 = vsub.s32 7, %v1103
      %v1105 = vrot.slane %v586, %v1104
      %v1106 = vlaneseq
      %v1107 = vshrl.u32 %v1106, 7
      %v1108 = vsub.s32 7, %v1107
      %v1109 = vrot.slane %v587, %v1108
      %v1110 = vlaneseq
      %v1111 = vshrl.u32 %v1110, 7
      %v1112 = vsub.s32 7, %v1111
      %v1113 = vrot.slane %v588, %v1112
      %v1114 = vmul.f32 %v904, %v1101
      %v1115 = vmul.f32 %v903, %v1105
      %v1116 = vmul.f32 %v902, %v1109
      %v1117 = vmul.f32 %v905, %v1113
      %v1118 = vadd.f32 %v1094, %v1114
      %v1119 = vadd.f32 %v1095, %v1115
      %v1120 = vadd.f32 %v1096, %v1116
      %v1121 = vadd.f32 %v1097, %v1117
      %v1122 = vlaneseq
      %v1123 = vshrl.u32 %v1122, 7
      %v1124 = vsub.s32 0, %v1123
      %v1125 = vrot.slane %v589, %v1124
      %v1126 = vlaneseq
      %v1127 = vshrl.u32 %v1126, 7
      %v1128 = vsub.s32 0, %v1127
      %v1129 = vrot.slane %v590, %v1128
      %v1130 = vlaneseq
      %v1131 = vshrl.u32 %v1130, 7
      %v1132 = vsub.s32 0, %v1131
      %v1133 = vrot.slane %v591, %v1132
      %v1134 = vlaneseq
      %v1135 = vshrl.u32 %v1134, 7
      %v1136 = vsub.s32 0, %v1135
      %v1137 = vrot.slane %v592, %v1136
      %v1138 = vmul.f32 %v940, %v1125
      %v1139 = vmul.f32 %v939, %v1129
      %v1140 = vmul.f32 %v938, %v1133
      %v1141 = vmul.f32 %v941, %v1137
      %v1142 = vadd.f32 %v1118, %v1138
      %v1143 = vadd.f32 %v1119, %v1139
      %v1144 = vadd.f32 %v1120, %v1140
      %v1145 = vadd.f32 %v1121, %v1141
      %v1146 = vlaneseq
      %v1147 = vshrl.u32 %v1146, 7
      %v1148 = vsub.s32 1, %v1147
      %v1149 = vrot.slane %v589, %v1148
      %v1150 = vlaneseq
      %v1151 = vshrl.u32 %v1150, 7
      %v1152 = vsub.s32 1, %v1151
      %v1153 = vrot.slane %v590, %v1152
      %v1154 = vlaneseq
      %v1155 = vshrl.u32 %v1154, 7
      %v1156 = vsub.s32 1, %v1155
      %v1157 = vrot.slane %v591, %v1156
      %v1158 = vlaneseq
      %v1159 = vshrl.u32 %v1158, 7
      %v1160 = vsub.s32 1, %v1159
      %v1161 = vrot.slane %v592, %v1160
      %v1162 = vmul.f32 %v976, %v1149
      %v1163 = vmul.f32 %v975, %v1153
      %v1164 = vmul.f32 %v974, %v1157
      %v1165 = vmul.f32 %v977, %v1161
      %v1166 = vadd.f32 %v1142, %v1162
      %v1167 = vadd.f32 %v1143, %v1163
      %v1168 = vadd.f32 %v1144, %v1164
      %v1169 = vadd.f32 %v1145, %v1165
      %v1170 = vrot.slane %v577, 1
      %v1171 = vrot.slane %v578, 1
      %v1172 = vrot.slane %v579, 1
      %v1173 = vrot.slane %v580, 1
      %v1174 = vadd.s32 %v598, 1
      %vm1175 = vcmp.ge.s32.totalorder %v1174, 0
      %vm1176 = vcmp.lt.s32.totalorder %v1174, 8
      %vm1177 = vmand %vm1175, %vm1176
      %v1178 = vsel %vm1177, %v1170, 0.0
      %v1179 = vsel %vm1177, %v1171, 0.0
      %v1180 = vsel %vm1177, %v1172, 0.0
      %v1181 = vsel %vm1177, %v1173, 0.0
      %1182 = vrot.lane.b32.xlu0 %v1178, 72
      %v1183 = vpop.permute.xlu0 %1182
      %1184 = vrot.lane.b32.xlu0 %v1179, 72
      %v1185 = vpop.permute.xlu0 %1184
      %1186 = vrot.lane.b32.xlu0 %v1180, 72
      %v1187 = vpop.permute.xlu0 %1186
      %1188 = vrot.lane.b32.xlu0 %v1181, 72
      %v1189 = vpop.permute.xlu0 %1188
      %v1190 = vsel %vm621, %v1187, %v1189
      %v1191 = vsel %vm621, %v1185, %v1187
      %v1192 = vsel %vm621, %v1183, %v1185
      %v1193 = vsel %vm621, %v1189, %v1183
      %v1194 = vlaneseq
      %v1195 = vshrl.u32 %v1194, 7
      %v1196 = vsub.s32 2, %v1195
      %v1197 = vrot.slane %v589, %v1196
      %v1198 = vlaneseq
      %v1199 = vshrl.u32 %v1198, 7
      %v1200 = vsub.s32 2, %v1199
      %v1201 = vrot.slane %v590, %v1200
      %v1202 = vlaneseq
      %v1203 = vshrl.u32 %v1202, 7
      %v1204 = vsub.s32 2, %v1203
      %v1205 = vrot.slane %v591, %v1204
      %v1206 = vlaneseq
      %v1207 = vshrl.u32 %v1206, 7
      %v1208 = vsub.s32 2, %v1207
      %v1209 = vrot.slane %v592, %v1208
      %v1210 = vmul.f32 %v1193, %v1197
      %v1211 = vmul.f32 %v1192, %v1201
      %v1212 = vmul.f32 %v1191, %v1205
      %v1213 = vmul.f32 %v1190, %v1209
      %v1214 = vadd.f32 %v1166, %v1210
      %v1215 = vadd.f32 %v1167, %v1211
      %v1216 = vadd.f32 %v1168, %v1212
      %v1217 = vadd.f32 %v1169, %v1213
      %1218 = vrot.lane.b32.xlu0 %v1178, 64
      %v1219 = vpop.permute.xlu0 %1218
      %1220 = vrot.lane.b32.xlu0 %v1179, 64
      %v1221 = vpop.permute.xlu0 %1220
      %1222 = vrot.lane.b32.xlu0 %v1180, 64
      %v1223 = vpop.permute.xlu0 %1222
      %1224 = vrot.lane.b32.xlu0 %v1181, 64
      %v1225 = vpop.permute.xlu0 %1224
      %v1226 = vsel %vm658, %v1223, %v1225
      %v1227 = vsel %vm658, %v1221, %v1223
      %v1228 = vsel %vm658, %v1219, %v1221
      %v1229 = vsel %vm658, %v1225, %v1219
      %v1230 = vlaneseq
      %v1231 = vshrl.u32 %v1230, 7
      %v1232 = vsub.s32 3, %v1231
      %v1233 = vrot.slane %v589, %v1232
      %v1234 = vlaneseq
      %v1235 = vshrl.u32 %v1234, 7
      %v1236 = vsub.s32 3, %v1235
      %v1237 = vrot.slane %v590, %v1236
      %v1238 = vlaneseq
      %v1239 = vshrl.u32 %v1238, 7
      %v1240 = vsub.s32 3, %v1239
      %v1241 = vrot.slane %v591, %v1240
      %v1242 = vlaneseq
      %v1243 = vshrl.u32 %v1242, 7
      %v1244 = vsub.s32 3, %v1243
      %v1245 = vrot.slane %v592, %v1244
      %v1246 = vmul.f32 %v1229, %v1233
      %v1247 = vmul.f32 %v1228, %v1237
      %v1248 = vmul.f32 %v1227, %v1241
      %v1249 = vmul.f32 %v1226, %v1245
      %v1250 = vadd.f32 %v1214, %v1246
      %v1251 = vadd.f32 %v1215, %v1247
      %v1252 = vadd.f32 %v1216, %v1248
      %v1253 = vadd.f32 %v1217, %v1249
      %1254 = vrot.lane.b32.xlu0 %v1178, 56
      %v1255 = vpop.permute.xlu0 %1254
      %1256 = vrot.lane.b32.xlu0 %v1179, 56
      %v1257 = vpop.permute.xlu0 %1256
      %1258 = vrot.lane.b32.xlu0 %v1180, 56
      %v1259 = vpop.permute.xlu0 %1258
      %1260 = vrot.lane.b32.xlu0 %v1181, 56
      %v1261 = vpop.permute.xlu0 %1260
      %v1262 = vsel %vm695, %v1259, %v1261
      %v1263 = vsel %vm695, %v1257, %v1259
      %v1264 = vsel %vm695, %v1255, %v1257
      %v1265 = vsel %vm695, %v1261, %v1255
      %v1266 = vlaneseq
      %v1267 = vshrl.u32 %v1266, 7
      %v1268 = vsub.s32 4, %v1267
      %v1269 = vrot.slane %v589, %v1268
      %v1270 = vlaneseq
      %v1271 = vshrl.u32 %v1270, 7
      %v1272 = vsub.s32 4, %v1271
      %v1273 = vrot.slane %v590, %v1272
      %v1274 = vlaneseq
      %v1275 = vshrl.u32 %v1274, 7
      %v1276 = vsub.s32 4, %v1275
      %v1277 = vrot.slane %v591, %v1276
      %v1278 = vlaneseq
      %v1279 = vshrl.u32 %v1278, 7
      %v1280 = vsub.s32 4, %v1279
      %v1281 = vrot.slane %v592, %v1280
      %v1282 = vmul.f32 %v1265, %v1269
      %v1283 = vmul.f32 %v1264, %v1273
      %v1284 = vmul.f32 %v1263, %v1277
      %v1285 = vmul.f32 %v1262, %v1281
      %v1286 = vadd.f32 %v1250, %v1282
      %v1287 = vadd.f32 %v1251, %v1283
      %v1288 = vadd.f32 %v1252, %v1284
      %v1289 = vadd.f32 %v1253, %v1285
      %1290 = vrot.lane.b32.xlu0 %v1178, 8
      %v1291 = vpop.permute.xlu0 %1290
      %1292 = vrot.lane.b32.xlu0 %v1179, 8
      %v1293 = vpop.permute.xlu0 %1292
      %1294 = vrot.lane.b32.xlu0 %v1180, 8
      %v1295 = vpop.permute.xlu0 %1294
      %1296 = vrot.lane.b32.xlu0 %v1181, 8
      %v1297 = vpop.permute.xlu0 %1296
      %v1298 = vsel %vm732, %v1295, %v1297
      %v1299 = vsel %vm732, %v1293, %v1295
      %v1300 = vsel %vm732, %v1291, %v1293
      %v1301 = vsel %vm732, %v1297, %v1291
      %v1302 = vlaneseq
      %v1303 = vshrl.u32 %v1302, 7
      %v1304 = vsub.s32 5, %v1303
      %v1305 = vrot.slane %v589, %v1304
      %v1306 = vlaneseq
      %v1307 = vshrl.u32 %v1306, 7
      %v1308 = vsub.s32 5, %v1307
      %v1309 = vrot.slane %v590, %v1308
      %v1310 = vlaneseq
      %v1311 = vshrl.u32 %v1310, 7
      %v1312 = vsub.s32 5, %v1311
      %v1313 = vrot.slane %v591, %v1312
      %v1314 = vlaneseq
      %v1315 = vshrl.u32 %v1314, 7
      %v1316 = vsub.s32 5, %v1315
      %v1317 = vrot.slane %v592, %v1316
      %v1318 = vmul.f32 %v1301, %v1305
      %v1319 = vmul.f32 %v1300, %v1309
      %v1320 = vmul.f32 %v1299, %v1313
      %v1321 = vmul.f32 %v1298, %v1317
      %v1322 = vadd.f32 %v1286, %v1318
      %v1323 = vadd.f32 %v1287, %v1319
      %v1324 = vadd.f32 %v1288, %v1320
      %v1325 = vadd.f32 %v1289, %v1321
      %v1326 = vlaneseq
      %v1327 = vshrl.u32 %v1326, 7
      %v1328 = vsub.s32 6, %v1327
      %v1329 = vrot.slane %v589, %v1328
      %v1330 = vlaneseq
      %v1331 = vshrl.u32 %v1330, 7
      %v1332 = vsub.s32 6, %v1331
      %v1333 = vrot.slane %v590, %v1332
      %v1334 = vlaneseq
      %v1335 = vshrl.u32 %v1334, 7
      %v1336 = vsub.s32 6, %v1335
      %v1337 = vrot.slane %v591, %v1336
      %v1338 = vlaneseq
      %v1339 = vshrl.u32 %v1338, 7
      %v1340 = vsub.s32 6, %v1339
      %v1341 = vrot.slane %v592, %v1340
      %v1342 = vmul.f32 %v1178, %v1329
      %v1343 = vmul.f32 %v1179, %v1333
      %v1344 = vmul.f32 %v1180, %v1337
      %v1345 = vmul.f32 %v1181, %v1341
      %v1346 = vadd.f32 %v1322, %v1342
      %v1347 = vadd.f32 %v1323, %v1343
      %v1348 = vadd.f32 %v1324, %v1344
      %v1349 = vadd.f32 %v1325, %v1345
      %1350 = vrot.lane.b32.xlu0 %v1178, 120
      %v1351 = vpop.permute.xlu0 %1350
      %1352 = vrot.lane.b32.xlu0 %v1179, 120
      %v1353 = vpop.permute.xlu0 %1352
      %1354 = vrot.lane.b32.xlu0 %v1180, 120
      %v1355 = vpop.permute.xlu0 %1354
      %1356 = vrot.lane.b32.xlu0 %v1181, 120
      %v1357 = vpop.permute.xlu0 %1356
      %v1358 = vsel %vm793, %v1355, %v1357
      %v1359 = vsel %vm793, %v1353, %v1355
      %v1360 = vsel %vm793, %v1351, %v1353
      %v1361 = vsel %vm793, %v1357, %v1351
      %v1362 = vlaneseq
      %v1363 = vshrl.u32 %v1362, 7
      %v1364 = vsub.s32 7, %v1363
      %v1365 = vrot.slane %v589, %v1364
      %v1366 = vlaneseq
      %v1367 = vshrl.u32 %v1366, 7
      %v1368 = vsub.s32 7, %v1367
      %v1369 = vrot.slane %v590, %v1368
      %v1370 = vlaneseq
      %v1371 = vshrl.u32 %v1370, 7
      %v1372 = vsub.s32 7, %v1371
      %v1373 = vrot.slane %v591, %v1372
      %v1374 = vlaneseq
      %v1375 = vshrl.u32 %v1374, 7
      %v1376 = vsub.s32 7, %v1375
      %v1377 = vrot.slane %v592, %v1376
      %v1378 = vmul.f32 %v1360, %v1365
      %v1379 = vmul.f32 %v1359, %v1369
      %v1380 = vmul.f32 %v1358, %v1373
      %v1381 = vmul.f32 %v1361, %v1377
      %v1382 = vadd.f32 %v1346, %v1378
      %v1383 = vadd.f32 %v1347, %v1379
      %v1384 = vadd.f32 %v1348, %v1380
      %v1385 = vadd.f32 %v1349, %v1381
      %v1386 = vlaneseq
      %v1387 = vshrl.u32 %v1386, 7
      %v1388 = vsub.s32 0, %v1387
      %v1389 = vrot.slane %v593, %v1388
      %v1390 = vlaneseq
      %v1391 = vshrl.u32 %v1390, 7
      %v1392 = vsub.s32 0, %v1391
      %v1393 = vrot.slane %v594, %v1392
      %v1394 = vlaneseq
      %v1395 = vshrl.u32 %v1394, 7
      %v1396 = vsub.s32 0, %v1395
      %v1397 = vrot.slane %v595, %v1396
      %v1398 = vlaneseq
      %v1399 = vshrl.u32 %v1398, 7
      %v1400 = vsub.s32 0, %v1399
      %v1401 = vrot.slane %v596, %v1400
      %v1402 = vmul.f32 %v1192, %v1389
      %v1403 = vmul.f32 %v1191, %v1393
      %v1404 = vmul.f32 %v1190, %v1397
      %v1405 = vmul.f32 %v1193, %v1401
      %v1406 = vadd.f32 %v1382, %v1402
      %v1407 = vadd.f32 %v1383, %v1403
      %v1408 = vadd.f32 %v1384, %v1404
      %v1409 = vadd.f32 %v1385, %v1405
      %v1410 = vlaneseq
      %v1411 = vshrl.u32 %v1410, 7
      %v1412 = vsub.s32 1, %v1411
      %v1413 = vrot.slane %v593, %v1412
      %v1414 = vlaneseq
      %v1415 = vshrl.u32 %v1414, 7
      %v1416 = vsub.s32 1, %v1415
      %v1417 = vrot.slane %v594, %v1416
      %v1418 = vlaneseq
      %v1419 = vshrl.u32 %v1418, 7
      %v1420 = vsub.s32 1, %v1419
      %v1421 = vrot.slane %v595, %v1420
      %v1422 = vlaneseq
      %v1423 = vshrl.u32 %v1422, 7
      %v1424 = vsub.s32 1, %v1423
      %v1425 = vrot.slane %v596, %v1424
      %v1426 = vmul.f32 %v1228, %v1413
      %v1427 = vmul.f32 %v1227, %v1417
      %v1428 = vmul.f32 %v1226, %v1421
      %v1429 = vmul.f32 %v1229, %v1425
      %v1430 = vadd.f32 %v1406, %v1426
      %v1431 = vadd.f32 %v1407, %v1427
      %v1432 = vadd.f32 %v1408, %v1428
      %v1433 = vadd.f32 %v1409, %v1429
      %v1434 = vlaneseq
      %v1435 = vshrl.u32 %v1434, 7
      %v1436 = vsub.s32 2, %v1435
      %v1437 = vrot.slane %v593, %v1436
      %v1438 = vlaneseq
      %v1439 = vshrl.u32 %v1438, 7
      %v1440 = vsub.s32 2, %v1439
      %v1441 = vrot.slane %v594, %v1440
      %v1442 = vlaneseq
      %v1443 = vshrl.u32 %v1442, 7
      %v1444 = vsub.s32 2, %v1443
      %v1445 = vrot.slane %v595, %v1444
      %v1446 = vlaneseq
      %v1447 = vshrl.u32 %v1446, 7
      %v1448 = vsub.s32 2, %v1447
      %v1449 = vrot.slane %v596, %v1448
      %v1450 = vmul.f32 %v1264, %v1437
      %v1451 = vmul.f32 %v1263, %v1441
      %v1452 = vmul.f32 %v1262, %v1445
      %v1453 = vmul.f32 %v1265, %v1449
      %v1454 = vadd.f32 %v1430, %v1450
      %v1455 = vadd.f32 %v1431, %v1451
      %v1456 = vadd.f32 %v1432, %v1452
      %v1457 = vadd.f32 %v1433, %v1453
      %v1458 = vld [vmem:[%s4] sm:$0xf]
      %v1460 = vlaneseq
      %v1461 = vshrl.u32 %v1460, 7
      %v1462 = vsub.s32 0, %v1461
      %v1463 = vrot.slane %v1458, %v1462
      %v1464 = vlaneseq
      %v1465 = vshrl.u32 %v1464, 7
      %v1466 = vsub.s32 1, %v1465
      %v1467 = vrot.slane %v1458, %v1466
      %v1468 = vlaneseq
      %v1469 = vshrl.u32 %v1468, 7
      %v1470 = vsub.s32 2, %v1469
      %v1471 = vrot.slane %v1458, %v1470
      %v1472 = vlaneseq
      %v1473 = vshrl.u32 %v1472, 7
      %v1474 = vsub.s32 3, %v1473
      %v1475 = vrot.slane %v1458, %v1474
      %v1480 = vadd.f32 %v1454, %v1463
      %v1481 = vadd.f32 %v1455, %v1467
      %v1482 = vadd.f32 %v1456, %v1471
      %v1483 = vadd.f32 %v1457, %v1475
      %v1484 = vmax.f32 %v1480, 0.0
      %v1485 = vmax.f32 %v1481, 0.0
      %v1486 = vmax.f32 %v1482, 0.0
      %v1487 = vmax.f32 %v1483, 0.0
      %v1488 = vmin.f32 %v1484, 6.0
      %v1489 = vmin.f32 %v1485, 6.0
      %v1490 = vmin.f32 %v1486, 6.0
      %v1491 = vmin.f32 %v1487, 6.0
      %v1492 = vld [vmem:[%s5] sm:$0xff]
      %v1493 = vld [vmem:[%s5 + $0x8] sm:$0xff]
      %v1494 = vld [vmem:[%s5 + $0x10] sm:$0xff]
      %v1495 = vld [vmem:[%s5 + $0x18] sm:$0xff]
      %v1496 = vld [vmem:[%s5 + $0x20] sm:$0xff]
      %v1497 = vld [vmem:[%s5 + $0x28] sm:$0xff]
      %v1498 = vld [vmem:[%s5 + $0x30] sm:$0xff]
      %v1499 = vld [vmem:[%s5 + $0x38] sm:$0xff]
      %v1500 = vld [vmem:[%s5 + $0x40] sm:$0xff]
      %v1501 = vld [vmem:[%s5 + $0x48] sm:$0xff]
      %v1502 = vld [vmem:[%s5 + $0x50] sm:$0xff]
      %v1503 = vld [vmem:[%s5 + $0x58] sm:$0xff]
      %v1504 = vld [vmem:[%s5 + $0x60] sm:$0xff]
      %v1505 = vld [vmem:[%s5 + $0x68] sm:$0xff]
      %v1506 = vld [vmem:[%s5 + $0x70] sm:$0xff]
      %v1507 = vld [vmem:[%s5 + $0x78] sm:$0xff]
      %v1508 = vld [vmem:[%s5 + $0x80] sm:$0xff]
      %v1509 = vld [vmem:[%s5 + $0x88] sm:$0xff]
      %v1510 = vld [vmem:[%s5 + $0x90] sm:$0xff]
      %v1511 = vld [vmem:[%s5 + $0x98] sm:$0xff]
      %v1512 = vld [vmem:[%s5 + $0xa0] sm:$0xff]
      %v1513 = vld [vmem:[%s5 + $0xa8] sm:$0xff]
      %v1514 = vld [vmem:[%s5 + $0xb0] sm:$0xff]
      %v1515 = vld [vmem:[%s5 + $0xb8] sm:$0xff]
      %v1516 = vld [vmem:[%s5 + $0xc0] sm:$0xff]
      %v1517 = vld [vmem:[%s5 + $0xc8] sm:$0xff]
      %v1518 = vld [vmem:[%s5 + $0xd0] sm:$0xff]
      %v1519 = vld [vmem:[%s5 + $0xd8] sm:$0xff]
      %v1520 = vld [vmem:[%s5 + $0xe0] sm:$0xff]
      %v1521 = vld [vmem:[%s5 + $0xe8] sm:$0xff]
      %v1522 = vld [vmem:[%s5 + $0xf0] sm:$0xff]
      %v1523 = vld [vmem:[%s5 + $0xf8] sm:$0xff]
      %v1524 = vld [vmem:[%s5 + $0x100] sm:$0xff]
      %v1525 = vld [vmem:[%s5 + $0x108] sm:$0xff]
      %v1526 = vld [vmem:[%s5 + $0x110] sm:$0xff]
      %v1527 = vld [vmem:[%s5 + $0x118] sm:$0xff]
      %v1528 = vld [vmem:[%s5 + $0x120] sm:$0xff]
      %v1529 = vld [vmem:[%s5 + $0x128] sm:$0xff]
      %v1530 = vld [vmem:[%s5 + $0x130] sm:$0xff]
      %v1531 = vld [vmem:[%s5 + $0x138] sm:$0xff]
      %v1532 = vld [vmem:[%s5 + $0x140] sm:$0xff]
      %v1533 = vld [vmem:[%s5 + $0x148] sm:$0xff]
      %v1534 = vld [vmem:[%s5 + $0x150] sm:$0xff]
      %v1535 = vld [vmem:[%s5 + $0x158] sm:$0xff]
      %v1536 = vld [vmem:[%s5 + $0x160] sm:$0xff]
      %v1537 = vld [vmem:[%s5 + $0x168] sm:$0xff]
      %v1538 = vld [vmem:[%s5 + $0x170] sm:$0xff]
      %v1539 = vld [vmem:[%s5 + $0x178] sm:$0xff]
      %v1540 = vld [vmem:[%s5 + $0x180] sm:$0xff]
      %v1541 = vld [vmem:[%s5 + $0x188] sm:$0xff]
      %v1542 = vld [vmem:[%s5 + $0x190] sm:$0xff]
      %v1543 = vld [vmem:[%s5 + $0x198] sm:$0xff]
      %v1544 = vld [vmem:[%s5 + $0x1a0] sm:$0xff]
      %v1545 = vld [vmem:[%s5 + $0x1a8] sm:$0xff]
      %v1546 = vld [vmem:[%s5 + $0x1b0] sm:$0xff]
      %v1547 = vld [vmem:[%s5 + $0x1b8] sm:$0xff]
      %v1548 = vld [vmem:[%s5 + $0x1c0] sm:$0xff]
      %v1549 = vld [vmem:[%s5 + $0x1c8] sm:$0xff]
      %v1550 = vld [vmem:[%s5 + $0x1d0] sm:$0xff]
      %v1551 = vld [vmem:[%s5 + $0x1d8] sm:$0xff]
      %v1552 = vld [vmem:[%s5 + $0x1e0] sm:$0xff]
      %v1553 = vld [vmem:[%s5 + $0x1e8] sm:$0xff]
      %v1554 = vld [vmem:[%s5 + $0x1f0] sm:$0xff]
      %v1555 = vld [vmem:[%s5 + $0x1f8] sm:$0xff]
      %v1556 = vld [vmem:[%s5 + $0x200] sm:$0xff]
      %v1557 = vld [vmem:[%s5 + $0x208] sm:$0xff]
      %v1558 = vld [vmem:[%s5 + $0x210] sm:$0xff]
      %v1559 = vld [vmem:[%s5 + $0x218] sm:$0xff]
      %v1560 = vld [vmem:[%s5 + $0x220] sm:$0xff]
      %v1561 = vld [vmem:[%s5 + $0x228] sm:$0xff]
      %v1562 = vld [vmem:[%s5 + $0x230] sm:$0xff]
      %v1563 = vld [vmem:[%s5 + $0x238] sm:$0xff]
      %v1564 = vld [vmem:[%s5 + $0x240] sm:$0xff]
      %v1565 = vld [vmem:[%s5 + $0x248] sm:$0xff]
      %v1566 = vld [vmem:[%s5 + $0x250] sm:$0xff]
      %v1567 = vld [vmem:[%s5 + $0x258] sm:$0xff]
      %v1568 = vld [vmem:[%s5 + $0x260] sm:$0xff]
      %v1569 = vld [vmem:[%s5 + $0x268] sm:$0xff]
      %v1570 = vld [vmem:[%s5 + $0x270] sm:$0xff]
      %v1571 = vld [vmem:[%s5 + $0x278] sm:$0xff]
      %v1572 = vld [vmem:[%s5 + $0x280] sm:$0xff]
      %v1573 = vld [vmem:[%s5 + $0x288] sm:$0xff]
      %v1574 = vld [vmem:[%s5 + $0x290] sm:$0xff]
      %v1575 = vld [vmem:[%s5 + $0x298] sm:$0xff]
      %v1576 = vld [vmem:[%s5 + $0x2a0] sm:$0xff]
      %v1577 = vld [vmem:[%s5 + $0x2a8] sm:$0xff]
      %v1578 = vld [vmem:[%s5 + $0x2b0] sm:$0xff]
      %v1579 = vld [vmem:[%s5 + $0x2b8] sm:$0xff]
      %v1580 = vld [vmem:[%s5 + $0x2c0] sm:$0xff]
      %v1581 = vld [vmem:[%s5 + $0x2c8] sm:$0xff]
      %v1582 = vld [vmem:[%s5 + $0x2d0] sm:$0xff]
      %v1583 = vld [vmem:[%s5 + $0x2d8] sm:$0xff]
      %v1584 = vld [vmem:[%s5 + $0x2e0] sm:$0xff]
      %v1585 = vld [vmem:[%s5 + $0x2e8] sm:$0xff]
      %v1586 = vld [vmem:[%s5 + $0x2f0] sm:$0xff]
      %v1587 = vld [vmem:[%s5 + $0x2f8] sm:$0xff]
      %v1588 = vld [vmem:[%s5 + $0x300] sm:$0xff]
      %v1589 = vld [vmem:[%s5 + $0x308] sm:$0xff]
      %v1590 = vld [vmem:[%s5 + $0x310] sm:$0xff]
      %v1591 = vld [vmem:[%s5 + $0x318] sm:$0xff]
      %v1592 = vld [vmem:[%s5 + $0x320] sm:$0xff]
      %v1593 = vld [vmem:[%s5 + $0x328] sm:$0xff]
      %v1594 = vld [vmem:[%s5 + $0x330] sm:$0xff]
      %v1595 = vld [vmem:[%s5 + $0x338] sm:$0xff]
      %v1596 = vld [vmem:[%s5 + $0x340] sm:$0xff]
      %v1597 = vld [vmem:[%s5 + $0x348] sm:$0xff]
      %v1598 = vld [vmem:[%s5 + $0x350] sm:$0xff]
      %v1599 = vld [vmem:[%s5 + $0x358] sm:$0xff]
      %v1600 = vld [vmem:[%s5 + $0x360] sm:$0xff]
      %v1601 = vld [vmem:[%s5 + $0x368] sm:$0xff]
      %v1602 = vld [vmem:[%s5 + $0x370] sm:$0xff]
      %v1603 = vld [vmem:[%s5 + $0x378] sm:$0xff]
      %v1604 = vld [vmem:[%s5 + $0x380] sm:$0xff]
      %v1605 = vld [vmem:[%s5 + $0x388] sm:$0xff]
      %v1606 = vld [vmem:[%s5 + $0x390] sm:$0xff]
      %v1607 = vld [vmem:[%s5 + $0x398] sm:$0xff]
      %v1608 = vld [vmem:[%s5 + $0x3a0] sm:$0xff]
      %v1609 = vld [vmem:[%s5 + $0x3a8] sm:$0xff]
      %v1610 = vld [vmem:[%s5 + $0x3b0] sm:$0xff]
      %v1611 = vld [vmem:[%s5 + $0x3b8] sm:$0xff]
      %v1612 = vld [vmem:[%s5 + $0x3c0] sm:$0xff]
      %v1613 = vld [vmem:[%s5 + $0x3c8] sm:$0xff]
      %v1614 = vld [vmem:[%s5 + $0x3d0] sm:$0xff]
      %v1615 = vld [vmem:[%s5 + $0x3d8] sm:$0xff]
      %v1616 = vld [vmem:[%s5 + $0x3e0] sm:$0xff]
      %v1617 = vld [vmem:[%s5 + $0x3e8] sm:$0xff]
      %v1618 = vld [vmem:[%s5 + $0x3f0] sm:$0xff]
      %v1619 = vld [vmem:[%s5 + $0x3f8] sm:$0xff]
      %v1620 = vld [vmem:[%s6] sm:$0x3]
      %v1622 = vlaneseq
      %v1623 = vshrl.u32 %v1622, 7
      %v1624 = vsub.s32 0, %v1623
      %v1625 = vrot.slane %v1620, %v1624
      %v1626 = vlaneseq
      %v1627 = vshrl.u32 %v1626, 7
      %v1628 = vsub.s32 1, %v1627
      %v1629 = vrot.slane %v1620, %v1628
      %1632 = vmatprep.subr.mxu0 %v1523
      %1633 = vmatpush1.msra.mxu0 %v1522
      %1634 = vmatprep.subr.mxu0 %v1521
      %1635 = vmatpush1.msra.mxu0 %v1520
      %1636 = vmatprep.subr.mxu0 %v1519
      %1637 = vmatpush1.msra.mxu0 %v1518
      %1638 = vmatprep.subr.mxu0 %v1517
      %1639 = vmatpush1.msra.mxu0 %v1516
      %1640 = vmatprep.subr.mxu0 %v1515
      %1641 = vmatpush1.msra.mxu0 %v1514
      %1642 = vmatprep.subr.mxu0 %v1513
      %1643 = vmatpush1.msra.mxu0 %v1512
      %1644 = vmatprep.subr.mxu0 %v1511
      %1645 = vmatpush1.msra.mxu0 %v1510
      %1646 = vmatprep.subr.mxu0 %v1509
      %1647 = vmatpush1.msra.mxu0 %v1508
      %1648 = vmatprep.subr.mxu0 %v1507
      %1649 = vmatpush1.msra.mxu0 %v1506
      %1650 = vmatprep.subr.mxu0 %v1505
      %1651 = vmatpush1.msra.mxu0 %v1504
      %1652 = vmatprep.subr.mxu0 %v1503
      %1653 = vmatpush1.msra.mxu0 %v1502
      %1654 = vmatprep.subr.mxu0 %v1501
      %1655 = vmatpush1.msra.mxu0 %v1500
      %1656 = vmatprep.subr.mxu0 %v1499
      %1657 = vmatpush1.msra.mxu0 %v1498
      %1658 = vmatprep.subr.mxu0 %v1497
      %1659 = vmatpush1.msra.mxu0 %v1496
      %1660 = vmatprep.subr.mxu0 %v1495
      %1661 = vmatpush1.msra.mxu0 %v1494
      %1662 = vmatprep.subr.mxu0 %v1493
      %1663 = vmatpush1.msra.mxu0 %v1492
      %1664 = vmatprep.subr.mxu0 %v1555
      %1665 = vmatpush2.msra.mxu0 %v1554
      %1666 = vmatprep.subr.mxu0 %v1553
      %1667 = vmatpush2.msra.mxu0 %v1552
      %1668 = vmatprep.subr.mxu0 %v1551
      %1669 = vmatpush2.msra.mxu0 %v1550
      %1670 = vmatprep.subr.mxu0 %v1549
      %1671 = vmatpush2.msra.mxu0 %v1548
      %1672 = vmatprep.subr.mxu0 %v1547
      %1673 = vmatpush2.msra.mxu0 %v1546
      %1674 = vmatprep.subr.mxu0 %v1545
      %1675 = vmatpush2.msra.mxu0 %v1544
      %1676 = vmatprep.subr.mxu0 %v1543
      %1677 = vmatpush2.msra.mxu0 %v1542
      %1678 = vmatprep.subr.mxu0 %v1541
      %1679 = vmatpush2.msra.mxu0 %v1540
      %1680 = vmatprep.subr.mxu0 %v1539
      %1681 = vmatpush2.msra.mxu0 %v1538
      %1682 = vmatprep.subr.mxu0 %v1537
      %1683 = vmatpush2.msra.mxu0 %v1536
      %1684 = vmatprep.subr.mxu0 %v1535
      %1685 = vmatpush2.msra.mxu0 %v1534
      %1686 = vmatprep.subr.mxu0 %v1533
      %1687 = vmatpush2.msra.mxu0 %v1532
      %1688 = vmatprep.subr.mxu0 %v1531
      %1689 = vmatpush2.msra.mxu0 %v1530
      %1690 = vmatprep.subr.mxu0 %v1529
      %1691 = vmatpush2.msra.mxu0 %v1528
      %1692 = vmatprep.subr.mxu0 %v1527
      %1693 = vmatpush2.msra.mxu0 %v1526
      %1694 = vmatprep.subr.mxu0 %v1525
      %1695 = vmatpush2.msra.mxu0 %v1524
      %1696 = vmatprep.mubr.f32.mxu0 %v1489
      %1697 = vmatmul.mubr.f32.gmra.mxu0 %v1488
      %v1698 = vpop.f32.mrf.mxu0
      %v1699 = vadd.f32 %v1625, %v1698
      %v1700 = vpop.f32.mrf.mxu0
      %v1701 = vadd.f32 %v1629, %v1700
      %1702 = vdwg.mxu0
      %1703 = vmatprep.subr.mxu0 %v1587
      %1704 = vmatpush1.msra.mxu0 %v1586
      %1705 = vmatprep.subr.mxu0 %v1585
      %1706 = vmatpush1.msra.mxu0 %v1584
      %1707 = vmatprep.subr.mxu0 %v1583
      %1708 = vmatpush1.msra.mxu0 %v1582
      %1709 = vmatprep.subr.mxu0 %v1581
      %1710 = vmatpush1.msra.mxu0 %v1580
      %1711 = vmatprep.subr.mxu0 %v1579
      %1712 = vmatpush1.msra.mxu0 %v1578
      %1713 = vmatprep.subr.mxu0 %v1577
      %1714 = vmatpush1.msra.mxu0 %v1576
      %1715 = vmatprep.subr.mxu0 %v1575
      %1716 = vmatpush1.msra.mxu0 %v1574
      %1717 = vmatprep.subr.mxu0 %v1573
      %1718 = vmatpush1.msra.mxu0 %v1572
      %1719 = vmatprep.subr.mxu0 %v1571
      %1720 = vmatpush1.msra.mxu0 %v1570
      %1721 = vmatprep.subr.mxu0 %v1569
      %1722 = vmatpush1.msra.mxu0 %v1568
      %1723 = vmatprep.subr.mxu0 %v1567
      %1724 = vmatpush1.msra.mxu0 %v1566
      %1725 = vmatprep.subr.mxu0 %v1565
      %1726 = vmatpush1.msra.mxu0 %v1564
      %1727 = vmatprep.subr.mxu0 %v1563
      %1728 = vmatpush1.msra.mxu0 %v1562
      %1729 = vmatprep.subr.mxu0 %v1561
      %1730 = vmatpush1.msra.mxu0 %v1560
      %1731 = vmatprep.subr.mxu0 %v1559
      %1732 = vmatpush1.msra.mxu0 %v1558
      %1733 = vmatprep.subr.mxu0 %v1557
      %1734 = vmatpush1.msra.mxu0 %v1556
      %1735 = vmatprep.subr.mxu0 %v1619
      %1736 = vmatpush2.msra.mxu0 %v1618
      %1737 = vmatprep.subr.mxu0 %v1617
      %1738 = vmatpush2.msra.mxu0 %v1616
      %1739 = vmatprep.subr.mxu0 %v1615
      %1740 = vmatpush2.msra.mxu0 %v1614
      %1741 = vmatprep.subr.mxu0 %v1613
      %1742 = vmatpush2.msra.mxu0 %v1612
      %1743 = vmatprep.subr.mxu0 %v1611
      %1744 = vmatpush2.msra.mxu0 %v1610
      %1745 = vmatprep.subr.mxu0 %v1609
      %1746 = vmatpush2.msra.mxu0 %v1608
      %1747 = vmatprep.subr.mxu0 %v1607
      %1748 = vmatpush2.msra.mxu0 %v1606
      %1749 = vmatprep.subr.mxu0 %v1605
      %1750 = vmatpush2.msra.mxu0 %v1604
      %1751 = vmatprep.subr.mxu0 %v1603
      %1752 = vmatpush2.msra.mxu0 %v1602
      %1753 = vmatprep.subr.mxu0 %v1601
      %1754 = vmatpush2.msra.mxu0 %v1600
      %1755 = vmatprep.subr.mxu0 %v1599
      %1756 = vmatpush2.msra.mxu0 %v1598
      %1757 = vmatprep.subr.mxu0 %v1597
      %1758 = vmatpush2.msra.mxu0 %v1596
      %1759 = vmatprep.subr.mxu0 %v1595
      %1760 = vmatpush2.msra.mxu0 %v1594
      %1761 = vmatprep.subr.mxu0 %v1593
      %1762 = vmatpush2.msra.mxu0 %v1592
      %1763 = vmatprep.subr.mxu0 %v1591
      %1764 = vmatpush2.msra.mxu0 %v1590
      %1765 = vmatprep.subr.mxu0 %v1589
      %1766 = vmatpush2.msra.mxu0 %v1588
      %1767 = vmatprep.mubr.f32.mxu0 %v1491
      %1768 = vmatmul.mubr.f32.gmra.mxu0 %v1490
      %v1769 = vpop.f32.mrf.mxu0
      %v1770 = vadd.f32 %v1699, %v1769
      %v1771 = vpop.f32.mrf.mxu0
      %v1772 = vadd.f32 %v1701, %v1771
      %1773 = vdwg.mxu0
      %v1774 = vadd.f32 %v1770, %v279
      %v1775 = vadd.f32 %v1772, %v280
      %1776 = vst [vmem:[%s278] sm:$0xff] %v1774
      %1777 = vst [vmem:[%s278 + $0x8] sm:$0xff] %v1775
      %p1778 = scmp.lt.s32.totalorder %s18, 1
      %s1779 = scalar_select %p1778, %s18, 1
      %s1780 = smul.addr %s1779, 2
      %s1781 = smul.addr %s1780, 8
      %s1782 = scalar_lea.vmem %s7, %s1781
      // Predicated region
      $region49: #{mobilev2_residual_3d.1} parent=47 // pred_check
        %p1783 = pneg %p188
      $region50: #{mobilev2_residual_3d.1} parent=47 // pred_check_branch
        %1785 = sbr.rel (%p1783) target = $region52
      $region51: #{mobilev2_residual_3d.1} parent=47 // pred_region
        _
      $region52: #{mobilev2_residual_3d.1} parent=47 // pred_fallthru
        _
    $region48: #{mobilev2_residual_3d.1} parent=5 // pred_fallthru
      _
    %p1786 = scmp.le.s32.totalorder 2, %s13
    // Predicated region
    $region53: #{mobilev2_residual_3d.1} parent=5 // pred_check
      %p1787 = pneg %p1786
    $region54: #{mobilev2_residual_3d.1} parent=5 // pred_check_branch
      %1789 = sbr.rel (%p1787) target = $region56
    $region55: #{mobilev2_residual_3d.1} parent=5 // pred_region
      %s1790 = ssub.s32 %s13, 2
      // Predicated region
      $region57: #{mobilev2_residual_3d.1} parent=55 // pred_check
        %p1791 = pneg %p194
      $region58: #{mobilev2_residual_3d.1} parent=55 // pred_check_branch
        %1793 = sbr.rel (%p1791) target = $region60
      $region59: #{mobilev2_residual_3d.1} parent=55 // pred_region
        %p1794 = scmp.lt.s32.totalorder %s19, 1
        %s1795 = scalar_select %p1794, %s19, 1
        %s1796 = smul.addr %s1795, 2
        %s1797 = smul.addr %s1796, 8
        %s1798 = scalar_lea.vmem %s7, %s1797
      $region60: #{mobilev2_residual_3d.1} parent=55 // pred_fallthru
        _
    $region56: #{mobilev2_residual_3d.1} parent=5 // pred_fallthru
      _
  $region6: #{mobilev2_residual_3d.1} parent=0 // loop_footer
    %s17 = sadd.s32 1, %s13
  $region7: #{mobilev2_residual_3d.1} parent=0 // loop_footer_branch
    %12 = sbr.rel target = $region3
  $region8: #{mobilev2_residual_3d.1} parent=0 // loop_exit
    _

</llo_original>
